<compile_context>
chip_gen: v6e
topology: v6e:2x2x1
jax: 0.10.0
libtpu: 0.0.40
codegen_flags: <defaults>
</compile_context>

<pallas_src>
import functools

import jax
import jax.numpy as jnp
from jax.experimental import pallas as pl
from jax.experimental.pallas import tpu as pltpu

KH = 3
KW = 3


def _conv3x3_residual_kernel(img_w, xcur_ref, xprev_ref, xnxt_ref, w_ref, b_ref, o_ref):
    """One (batch, row-tile) grid step.

    xcur_ref:  (1, Cin, TW)   current row tile, spatial flattened on the lane axis
    xprev_ref: (1, Cin, HB)   halo granule ending exactly at this tile's start
    xnxt_ref:  (1, Cin, HB)   halo granule starting exactly at this tile's end
    w_ref:     (9, Cout, Cin) conv weight, tap-major (kh, kw)
    b_ref:     (Cout, 1)      bias (f32)
    o_ref:     (1, Cout, TW)  output tile
    """
    i = pl.program_id(1)
    last = pl.num_programs(1) - 1

    cur = xcur_ref[0]                         # (Cin, TW), input dtype
    cin, tw = cur.shape
    cout = o_ref.shape[1]
    hb = xprev_ref.shape[2]
    halo = img_w + 1                          # halo lanes actually needed per side

    # Halo rows; zeroed at the image top/bottom -> conv 'same' padding along H.
    prev = xprev_ref[0, :, hb - halo:]        # last W+1 lanes of the previous granule
    nxt = xnxt_ref[0, :, :halo]               # first W+1 lanes of the next granule
    prev = jnp.where(i > 0, prev, jnp.zeros_like(prev))
    nxt = jnp.where(i < last, nxt, jnp.zeros_like(nxt))

    # Window over flat lanes [tile_start - W - 1, tile_start + TW + W + 1).
    win = jnp.concatenate([prev, cur, nxt], axis=-1)          # (Cin, TW + 2W + 2)

    # Conv 'same' padding along W: tap (kh, kw) reads window position
    # p = j + kh*W + kw for output lane j, so the kw=0 taps must be zero exactly
    # where p % W == 0 and the kw=2 taps where p % W == 1, independent of kh.
    # Two pre-masked window copies therefore replace six per-tap selects.
    pos = jax.lax.broadcasted_iota(jnp.int32, (1, win.shape[1]), 1) % img_w
    zeros_win = jnp.zeros_like(win)
    win_l = jnp.where(pos != 0, win, zeros_win)               # used by kw == 0 taps
    win_r = jnp.where(pos != 1, win, zeros_win)               # used by kw == 2 taps
    wins = (win_l, win, win_r)

    use_mxu = cin >= 8          # MXU once the contraction dim fills a sublane group
    acc = jnp.zeros((cout, tw), jnp.float32)
    for kh in range(KH):
        for kw in range(KW):
            if kh == 1 and kw == 1:
                tap = cur                                     # centre tap == the tile
            else:
                s = kh * img_w + kw
                tap = wins[kw][:, s:s + tw]                   # (Cin, TW), input dtype
            wk = w_ref[kh * KW + kw]                          # (Cout, Cin), input dtype
            if use_mxu:
                # Operands stay in the input dtype (bf16-in / f32-acc on the MXU);
                # 9 K=Cin matmuls avoid any big im2col temporary.
                acc = acc + jnp.dot(wk, tap, preferred_element_type=jnp.float32)
            else:
                # Tiny channel count: exact-f32 rank-1 FMAs on the VPU
                # (no (Cout, Cin, TW) broadcast temporary, no MXU rounding).
                wk32 = wk.astype(jnp.float32)
                tap32 = tap.astype(jnp.float32)
                for ci in range(cin):
                    acc = acc + wk32[:, ci:ci + 1] * tap32[ci:ci + 1, :]

    acc = acc + b_ref[...].astype(jnp.float32)
    acc = acc + cur.astype(jnp.float32)                       # residual: + x
    o_ref[...] = acc[None].astype(o_ref.dtype)


def _halo_block_lanes(tile_lanes, img_w):
    """Smallest 128-lane-aligned granule that divides the tile and holds a W+1 halo."""
    need = img_w + 1
    hb = ((need + 127) // 128) * 128
    while hb < tile_lanes and tile_lanes % hb != 0:
        hb += 128
    if hb > tile_lanes or tile_lanes % hb != 0:
        return tile_lanes         # fallback: full-tile halo granule (still correct)
    return hb


def _estimate_vmem_bytes(cin, cout, th, img_w, itemsize):
    tw = th * img_w
    hb = _halo_block_lanes(tw, img_w)
    # double-buffered pipeline blocks + tiny resident weight/bias blocks
    blocks = 2 * (cin * tw + 2 * cin * hb + cout * tw) * itemsize
    params = 2 * (KH * KW * cout * cin + cout) * itemsize
    # in-kernel temporaries: 3 windows, ~2 live taps, f32 accumulator (x2 slack)
    win = cin * (tw + 2 * img_w + 2)
    temps = (3 * win + 2 * cin * tw) * itemsize + 2 * cout * tw * 4
    return blocks + params + temps


def _pick_row_tile(n_batch, cin, cout, h, img_w, itemsize, vmem_budget):
    cands = []
    for th in range(2, h + 1):
        if h % th:
            continue
        if (th * img_w) % 128 != 0 and th != h:
            continue                               # keep loads/stores lane-dense
        cands.append(th)
    assert cands, "image too small for a 3x3 'same' convolution tiling"
    est = lambda t: _estimate_vmem_bytes(cin, cout, t, img_w, itemsize)
    fitting = [t for t in cands if est(t) <= vmem_budget]
    pool = fitting if fitting else [min(cands, key=est)]
    if n_batch == 1:
        multi = [t for t in pool if h // t >= 2]   # keep a >=2 'parallel' axis (megacore)
        if multi:
            pool = multi
    pref = [t for t in pool if t * img_w <= 4096]  # big-but-bounded flat tiles
    return max(pref) if pref else min(pool)


def resnet_forward(x_nchw, weight, bias, *, row_tile=None):
    """Forward of ResNet(Conv2d(C, C, 3, padding=1)): conv(x) + x.  NCHW in/out."""
    n, c, h, w = x_nchw.shape
    cout, cin, kh, kw = weight.shape
    assert (kh, kw) == (KH, KW) and cin == c and cout == c, \
        "wrapped module must be a shape-preserving Conv2d(C, C, 3, padding=1)"
    assert h >= 2 and w >= 2

    itemsize = jnp.dtype(x_nchw.dtype).itemsize

    # Per-generation VMEM budgeting (≈48 MiB ceiling on v7x, ≈96 MiB on v5e/v6e).
    try:
        phys_vmem = int(pltpu.get_tpu_info().vmem_capacity_bytes)
    except Exception:
        phys_vmem = 64 << 20
    vmem_limit = max(32 << 20, min(phys_vmem * 3 // 4, 100 << 20))

    if row_tile is None:
        th = _pick_row_tile(n, c, cout, h, w, itemsize, (vmem_limit * 7) // 10)
    else:
        th = int(row_tile)
        if h % th != 0 or th < 2:
            raise ValueError("row_tile must be a divisor of H and >= 2")
        if (th * w) % 128 != 0 and th != h:
            raise ValueError("row_tile * W must be a multiple of 128 (lane-dense "
                             "stores) unless a single row tile covers the image")
    n_row_tiles = h // th
    twl = th * w                         # flat lane width of one row tile
    hb = _halo_block_lanes(twl, w)       # lanes per halo granule
    r = twl // hb                        # halo granules per row tile
    nb = (h * w) // hb                   # halo granules per image

    # Pure metadata reshape -- no wrapper-side pad / transpose / copy.
    x_flat = x_nchw.reshape(n, c, h * w)
    # Tap-major weights (9, Cout, Cin): the kernel indexes taps on the leading axis
    # (no lane-dim weight slicing); keep them in the activation dtype so the MXU
    # runs bf16-in/f32-acc for bf16 activations.
    w_taps = jnp.transpose(weight, (2, 3, 0, 1)).reshape(KH * KW, cout, cin)
    w_taps = w_taps.astype(x_nchw.dtype)
    b2d = bias.reshape(cout, 1).astype(jnp.float32)

    kernel = functools.partial(_conv3x3_residual_kernel, w)

    flops = 2 * n * h * w * KH * KW * cin * cout + 2 * n * h * w * cout
    bytes_accessed = int(
        itemsize * (n * c * h * w                       # input tiles (fetched once)
                    + 2 * n * n_row_tiles * c * hb      # halo granules
                    + n * cout * h * w                  # output
                    + w_taps.size) + 4 * b2d.size)

    out_flat = pl.pallas_call(
        kernel,
        out_shape=jax.ShapeDtypeStruct((n, cout, h * w), x_nchw.dtype),
        grid_spec=pltpu.PrefetchScalarGridSpec(
            num_scalar_prefetch=0,
            grid=(n, n_row_tiles),
            in_specs=[
                # current row tile (also supplies the residual / centre tap)
                pl.BlockSpec((1, c, twl), lambda b, i: (b, 0, i)),
                # halo-only fetches: the aligned granule just before / just after
                # this tile (clamped at the image edges, where the kernel zeroes
                # the halo anyway)
                pl.BlockSpec((1, c, hb),
                             lambda b, i: (b, 0, jnp.maximum(i * r - 1, 0))),
                pl.BlockSpec((1, c, hb),
                             lambda b, i: (b, 0, jnp.minimum((i + 1) * r, nb - 1))),
                # weights / bias: tiny constant blocks -> fetched once
                pl.BlockSpec((KH * KW, cout, cin), lambda b, i: (0, 0, 0)),
                pl.BlockSpec((cout, 1), lambda b, i: (0, 0)),
            ],
            out_specs=pl.BlockSpec((1, cout, twl), lambda b, i: (b, 0, i)),
        ),
        compiler_params=pltpu.CompilerParams(
            dimension_semantics=("parallel", "parallel"),
            vmem_limit_bytes=vmem_limit),
        cost_estimate=pl.CostEstimate(
            flops=flops, transcendentals=0, bytes_accessed=bytes_accessed),
    )(x_flat, x_flat, x_flat, w_taps, b2d)

    # Metadata reshape back to NCHW.
    return out_flat.reshape(n, cout, h, w)


def _reference(x_nchw, weight, bias):
    """Pure-JAX reference: conv2d(x, W, b, padding=1) + x, NCHW, exact f32."""
    y = jax.lax.conv_general_dilated(
        x_nchw, weight,
        window_strides=(1, 1),
        padding=((1, 1), (1, 1)),
        dimension_numbers=("NCHW", "OIHW", "NCHW"),
        precision=jax.lax.Precision.HIGHEST)
    return y + bias[None, :, None, None] + x_nchw


def _make_conv_params(key, c, dtype=jnp.float32):
    kw_, kb = jax.random.split(key)
    fan_in = c * KH * KW
    bound = 1.0 / (fan_in ** 0.5)
    weight = jax.random.uniform(kw_, (c, c, KH, KW), dtype, -bound, bound)
    bias = jax.random.uniform(kb, (c,), dtype, -bound, bound)
    return weight, bias


if __name__ == "__main__":
    key = jax.random.PRNGKey(0)
    k1, k2, k3 = jax.random.split(key, 3)

    # --- channels=4 (module-sized demo): exact VPU contraction path -------------
    N, C, H, W = 2, 4, 16, 16
    x = jax.random.normal(k1, (N, C, H, W), dtype=jnp.float32)
    weight, bias = _make_conv_params(k2, C)
    ref = _reference(x, weight, bias)

    # auto-picked tile: 256-lane blocks, grid (2, 1)
    out = jax.block_until_ready(resnet_forward(x, weight, bias))
    assert out.shape == (N, C, H, W)
    assert jnp.max(jnp.abs(out - ref)) < 1e-4

    # explicit row_tile=8: grid (2, 2), exercises the multi-tile halo-granule path
    out2 = jax.block_until_ready(resnet_forward(x, weight, bias, row_tile=8))
    assert jnp.max(jnp.abs(out2 - ref)) < 1e-4

    # --- channels=16: exercises the per-tap MXU matmul path ----------------------
    C2 = 16
    x2 = jax.random.normal(k3, (N, C2, H, W), dtype=jnp.float32)
    weight2, bias2 = _make_conv_params(k2, C2)
    ref2 = _reference(x2, weight2, bias2)
    out3 = jax.block_until_ready(resnet_forward(x2, weight2, bias2, row_tile=8))
    # f32 MXU matmuls may use bf16 passes -> looser tolerance than the exact path.
    assert jnp.max(jnp.abs(out3 - ref2)) < 3e-2

    print("KERNEL_OK")
</pallas_src>

<mosaic_0001>
module attributes {stable_mosaic.version = 11 : i64} {
  func.func @_conv3x3_residual_kernel(%arg0: i32, %arg1: i32, %arg2: memref<1x4x256xf32, #tpu.memory_space<vmem>>, %arg3: memref<1x4x128xf32, #tpu.memory_space<vmem>>, %arg4: memref<1x4x128xf32, #tpu.memory_space<vmem>>, %arg5: memref<9x4x4xf32, #tpu.memory_space<vmem>>, %arg6: memref<4x1xf32, #tpu.memory_space<vmem>>, %arg7: memref<1x4x256xf32, #tpu.memory_space<vmem>>) attributes {dimension_semantics = [#tpu.dimension_semantics<parallel>, #tpu.dimension_semantics<parallel>], iteration_bounds = array<i64: 2, 1>, scalar_prefetch = 0 : i64, scratch_operands = 0 : i64, tpu.core_type = #tpu.core_type<tc>, window_params = [{transform_indices = @transform_0, window_bounds = array<i64: 1, 4, 256>}, {transform_indices = @transform_1, window_bounds = array<i64: 1, 4, 128>}, {transform_indices = @transform_2, window_bounds = array<i64: 1, 4, 128>}, {pipeline_mode = #tpu.pipeline_mode<synchronous>, transform_indices = @transform_3, window_bounds = array<i64: 9, 4, 4>}, {pipeline_mode = #tpu.pipeline_mode<synchronous>, transform_indices = @transform_4, window_bounds = array<i64: 4, 1>}, {transform_indices = @transform_5, window_bounds = array<i64: 1, 4, 256>}]} {
    %c0 = arith.constant 0 : index
    %c0_0 = arith.constant 0 : index
    %c0_1 = arith.constant 0 : index
    %0 = vector.load %arg2[%c0, %c0_0, %c0_1] : memref<1x4x256xf32, #tpu.memory_space<vmem>>, vector<1x4x256xf32>
    %1 = vector.shape_cast %0 : vector<1x4x256xf32> to vector<4x256xf32>
    %c0_2 = arith.constant 0 : index
    %c0_3 = arith.constant 0 : index
    %c111 = arith.constant 111 : index
    %2 = vector.load %arg3[%c0_2, %c0_3, %c111] : memref<1x4x128xf32, #tpu.memory_space<vmem>>, vector<1x4x17xf32>
    %3 = vector.shape_cast %2 : vector<1x4x17xf32> to vector<4x17xf32>
    %c0_4 = arith.constant 0 : index
    %c0_5 = arith.constant 0 : index
    %c0_6 = arith.constant 0 : index
    %4 = vector.load %arg4[%c0_4, %c0_5, %c0_6] : memref<1x4x128xf32, #tpu.memory_space<vmem>>, vector<1x4x17xf32>
    %5 = vector.shape_cast %4 : vector<1x4x17xf32> to vector<4x17xf32>
    %c0_i32 = arith.constant 0 : i32
    %6 = arith.cmpi sgt, %arg1, %c0_i32 : i32
    %cst = arith.constant 0.000000e+00 : f32
    %7 = vector.broadcast %cst : f32 to vector<4x17xf32>
    %8 = arith.select %6, %3, %7 : vector<4x17xf32>
    %c0_i32_7 = arith.constant 0 : i32
    %9 = arith.cmpi slt, %arg1, %c0_i32_7 : i32
    %cst_8 = arith.constant 0.000000e+00 : f32
    %10 = vector.broadcast %cst_8 : f32 to vector<4x17xf32>
    %11 = arith.select %9, %5, %10 : vector<4x17xf32>
    %12 = tpu.concatenate %8, %1, %11 in 1 : vector<4x17xf32>, vector<4x256xf32>, vector<4x17xf32> -> vector<4x290xf32>
    %13 = tpu.iota {dimensions = array<i32: 1>} : vector<1x290xi32>
    %c16_i32 = arith.constant 16 : i32
    %c0_i32_9 = arith.constant 0 : i32
    %14 = arith.cmpi eq, %c16_i32, %c0_i32_9 : i32
    %c1_i32 = arith.constant 1 : i32
    %15 = arith.select %14, %c1_i32, %c16_i32 : i32
    %16 = vector.broadcast %15 : i32 to vector<1x290xi32>
    %17 = arith.remsi %13, %16 : vector<1x290xi32>
    %c0_i32_10 = arith.constant 0 : i32
    %18 = vector.broadcast %c0_i32_10 : i32 to vector<1x290xi32>
    %19 = arith.cmpi ne, %17, %18 : vector<1x290xi32>
    %c0_i32_11 = arith.constant 0 : i32
    %20 = vector.broadcast %c0_i32_11 : i32 to vector<1x290xi32>
    %21 = arith.cmpi slt, %17, %20 : vector<1x290xi32>
    %c0_i32_12 = arith.constant 0 : i32
    %22 = arith.cmpi slt, %15, %c0_i32_12 : i32
    %23 = vector.broadcast %22 : i1 to vector<1x290xi1>
    %24 = vector.broadcast %23 : vector<1x290xi1> to vector<1x290xi1>
    %25 = arith.xori %21, %24 : vector<1x290xi1>
    %26 = arith.andi %25, %19 : vector<1x290xi1>
    %27 = vector.broadcast %15 : i32 to vector<1x290xi32>
    %28 = arith.addi %17, %27 : vector<1x290xi32>
    %29 = arith.select %26, %28, %17 : vector<1x290xi1>, vector<1x290xi32>
    %cst_13 = arith.constant 0.000000e+00 : f32
    %30 = vector.broadcast %cst_13 : f32 to vector<4x290xf32>
    %c0_i32_14 = arith.constant 0 : i32
    %31 = vector.broadcast %c0_i32_14 : i32 to vector<1x290xi32>
    %32 = arith.cmpi ne, %29, %31 : vector<1x290xi32>
    %33 = vector.shape_cast %32 : vector<1x290xi1> to vector<1x290xi1>
    %34 = vector.broadcast %33 : vector<1x290xi1> to vector<4x290xi1>
    %35 = arith.select %34, %12, %30 : vector<4x290xi1>, vector<4x290xf32>
    %c1_i32_15 = arith.constant 1 : i32
    %36 = vector.broadcast %c1_i32_15 : i32 to vector<1x290xi32>
    %37 = arith.cmpi ne, %29, %36 : vector<1x290xi32>
    %38 = vector.shape_cast %37 : vector<1x290xi1> to vector<1x290xi1>
    %39 = vector.broadcast %38 : vector<1x290xi1> to vector<4x290xi1>
    %40 = arith.select %39, %12, %30 : vector<4x290xi1>, vector<4x290xf32>
    %cst_16 = arith.constant 0.000000e+00 : f32
    %41 = vector.broadcast %cst_16 : f32 to vector<4x256xf32>
    %42 = vector.extract_strided_slice %35 {offsets = [0, 0], sizes = [4, 256], strides = [1, 1]} : vector<4x290xf32> to vector<4x256xf32>
    %c0_17 = arith.constant 0 : index
    %c0_18 = arith.constant 0 : index
    %c0_19 = arith.constant 0 : index
    %43 = vector.load %arg5[%c0_17, %c0_18, %c0_19] : memref<9x4x4xf32, #tpu.memory_space<vmem>>, vector<1x4x4xf32>
    %44 = vector.shape_cast %43 : vector<1x4x4xf32> to vector<4x4xf32>
    %45 = vector.extract_strided_slice %44 {offsets = [0, 0], sizes = [4, 1], strides = [1, 1]} : vector<4x4xf32> to vector<4x1xf32>
    %46 = vector.extract_strided_slice %42 {offsets = [0, 0], sizes = [1, 256], strides = [1, 1]} : vector<4x256xf32> to vector<1x256xf32>
    %47 = vector.broadcast %45 : vector<4x1xf32> to vector<4x256xf32>
    %48 = vector.broadcast %46 : vector<1x256xf32> to vector<4x256xf32>
    %49 = arith.mulf %47, %48 : vector<4x256xf32>
    %50 = arith.addf %41, %49 : vector<4x256xf32>
    %51 = vector.extract_strided_slice %44 {offsets = [0, 1], sizes = [4, 1], strides = [1, 1]} : vector<4x4xf32> to vector<4x1xf32>
    %52 = vector.extract_strided_slice %42 {offsets = [1, 0], sizes = [1, 256], strides = [1, 1]} : vector<4x256xf32> to vector<1x256xf32>
    %53 = vector.broadcast %51 : vector<4x1xf32> to vector<4x256xf32>
    %54 = vector.broadcast %52 : vector<1x256xf32> to vector<4x256xf32>
    %55 = arith.mulf %53, %54 : vector<4x256xf32>
    %56 = arith.addf %50, %55 : vector<4x256xf32>
    %57 = vector.extract_strided_slice %44 {offsets = [0, 2], sizes = [4, 1], strides = [1, 1]} : vector<4x4xf32> to vector<4x1xf32>
    %58 = vector.extract_strided_slice %42 {offsets = [2, 0], sizes = [1, 256], strides = [1, 1]} : vector<4x256xf32> to vector<1x256xf32>
    %59 = vector.broadcast %57 : vector<4x1xf32> to vector<4x256xf32>
    %60 = vector.broadcast %58 : vector<1x256xf32> to vector<4x256xf32>
    %61 = arith.mulf %59, %60 : vector<4x256xf32>
    %62 = arith.addf %56, %61 : vector<4x256xf32>
    %63 = vector.extract_strided_slice %44 {offsets = [0, 3], sizes = [4, 1], strides = [1, 1]} : vector<4x4xf32> to vector<4x1xf32>
    %64 = vector.extract_strided_slice %42 {offsets = [3, 0], sizes = [1, 256], strides = [1, 1]} : vector<4x256xf32> to vector<1x256xf32>
    %65 = vector.broadcast %63 : vector<4x1xf32> to vector<4x256xf32>
    %66 = vector.broadcast %64 : vector<1x256xf32> to vector<4x256xf32>
    %67 = arith.mulf %65, %66 : vector<4x256xf32>
    %68 = arith.addf %62, %67 : vector<4x256xf32>
    %69 = vector.extract_strided_slice %12 {offsets = [0, 1], sizes = [4, 256], strides = [1, 1]} : vector<4x290xf32> to vector<4x256xf32>
    %c1 = arith.constant 1 : index
    %c0_20 = arith.constant 0 : index
    %c0_21 = arith.constant 0 : index
    %70 = vector.load %arg5[%c1, %c0_20, %c0_21] : memref<9x4x4xf32, #tpu.memory_space<vmem>>, vector<1x4x4xf32>
    %71 = vector.shape_cast %70 : vector<1x4x4xf32> to vector<4x4xf32>
    %72 = vector.extract_strided_slice %71 {offsets = [0, 0], sizes = [4, 1], strides = [1, 1]} : vector<4x4xf32> to vector<4x1xf32>
    %73 = vector.extract_strided_slice %69 {offsets = [0, 0], sizes = [1, 256], strides = [1, 1]} : vector<4x256xf32> to vector<1x256xf32>
    %74 = vector.broadcast %72 : vector<4x1xf32> to vector<4x256xf32>
    %75 = vector.broadcast %73 : vector<1x256xf32> to vector<4x256xf32>
    %76 = arith.mulf %74, %75 : vector<4x256xf32>
    %77 = arith.addf %68, %76 : vector<4x256xf32>
    %78 = vector.extract_strided_slice %71 {offsets = [0, 1], sizes = [4, 1], strides = [1, 1]} : vector<4x4xf32> to vector<4x1xf32>
    %79 = vector.extract_strided_slice %69 {offsets = [1, 0], sizes = [1, 256], strides = [1, 1]} : vector<4x256xf32> to vector<1x256xf32>
    %80 = vector.broadcast %78 : vector<4x1xf32> to vector<4x256xf32>
    %81 = vector.broadcast %79 : vector<1x256xf32> to vector<4x256xf32>
    %82 = arith.mulf %80, %81 : vector<4x256xf32>
    %83 = arith.addf %77, %82 : vector<4x256xf32>
    %84 = vector.extract_strided_slice %71 {offsets = [0, 2], sizes = [4, 1], strides = [1, 1]} : vector<4x4xf32> to vector<4x1xf32>
    %85 = vector.extract_strided_slice %69 {offsets = [2, 0], sizes = [1, 256], strides = [1, 1]} : vector<4x256xf32> to vector<1x256xf32>
    %86 = vector.broadcast %84 : vector<4x1xf32> to vector<4x256xf32>
    %87 = vector.broadcast %85 : vector<1x256xf32> to vector<4x256xf32>
    %88 = arith.mulf %86, %87 : vector<4x256xf32>
    %89 = arith.addf %83, %88 : vector<4x256xf32>
    %90 = vector.extract_strided_slice %71 {offsets = [0, 3], sizes = [4, 1], strides = [1, 1]} : vector<4x4xf32> to vector<4x1xf32>
    %91 = vector.extract_strided_slice %69 {offsets = [3, 0], sizes = [1, 256], strides = [1, 1]} : vector<4x256xf32> to vector<1x256xf32>
    %92 = vector.broadcast %90 : vector<4x1xf32> to vector<4x256xf32>
    %93 = vector.broadcast %91 : vector<1x256xf32> to vector<4x256xf32>
    %94 = arith.mulf %92, %93 : vector<4x256xf32>
    %95 = arith.addf %89, %94 : vector<4x256xf32>
    %96 = vector.extract_strided_slice %40 {offsets = [0, 2], sizes = [4, 256], strides = [1, 1]} : vector<4x290xf32> to vector<4x256xf32>
    %c2 = arith.constant 2 : index
    %c0_22 = arith.constant 0 : index
    %c0_23 = arith.constant 0 : index
    %97 = vector.load %arg5[%c2, %c0_22, %c0_23] : memref<9x4x4xf32, #tpu.memory_space<vmem>>, vector<1x4x4xf32>
    %98 = vector.shape_cast %97 : vector<1x4x4xf32> to vector<4x4xf32>
    %99 = vector.extract_strided_slice %98 {offsets = [0, 0], sizes = [4, 1], strides = [1, 1]} : vector<4x4xf32> to vector<4x1xf32>
    %100 = vector.extract_strided_slice %96 {offsets = [0, 0], sizes = [1, 256], strides = [1, 1]} : vector<4x256xf32> to vector<1x256xf32>
    %101 = vector.broadcast %99 : vector<4x1xf32> to vector<4x256xf32>
    %102 = vector.broadcast %100 : vector<1x256xf32> to vector<4x256xf32>
    %103 = arith.mulf %101, %102 : vector<4x256xf32>
    %104 = arith.addf %95, %103 : vector<4x256xf32>
    %105 = vector.extract_strided_slice %98 {offsets = [0, 1], sizes = [4, 1], strides = [1, 1]} : vector<4x4xf32> to vector<4x1xf32>
    %106 = vector.extract_strided_slice %96 {offsets = [1, 0], sizes = [1, 256], strides = [1, 1]} : vector<4x256xf32> to vector<1x256xf32>
    %107 = vector.broadcast %105 : vector<4x1xf32> to vector<4x256xf32>
    %108 = vector.broadcast %106 : vector<1x256xf32> to vector<4x256xf32>
    %109 = arith.mulf %107, %108 : vector<4x256xf32>
    %110 = arith.addf %104, %109 : vector<4x256xf32>
    %111 = vector.extract_strided_slice %98 {offsets = [0, 2], sizes = [4, 1], strides = [1, 1]} : vector<4x4xf32> to vector<4x1xf32>
    %112 = vector.extract_strided_slice %96 {offsets = [2, 0], sizes = [1, 256], strides = [1, 1]} : vector<4x256xf32> to vector<1x256xf32>
    %113 = vector.broadcast %111 : vector<4x1xf32> to vector<4x256xf32>
    %114 = vector.broadcast %112 : vector<1x256xf32> to vector<4x256xf32>
    %115 = arith.mulf %113, %114 : vector<4x256xf32>
    %116 = arith.addf %110, %115 : vector<4x256xf32>
    %117 = vector.extract_strided_slice %98 {offsets = [0, 3], sizes = [4, 1], strides = [1, 1]} : vector<4x4xf32> to vector<4x1xf32>
    %118 = vector.extract_strided_slice %96 {offsets = [3, 0], sizes = [1, 256], strides = [1, 1]} : vector<4x256xf32> to vector<1x256xf32>
    %119 = vector.broadcast %117 : vector<4x1xf32> to vector<4x256xf32>
    %120 = vector.broadcast %118 : vector<1x256xf32> to vector<4x256xf32>
    %121 = arith.mulf %119, %120 : vector<4x256xf32>
    %122 = arith.addf %116, %121 : vector<4x256xf32>
    %123 = vector.extract_strided_slice %35 {offsets = [0, 16], sizes = [4, 256], strides = [1, 1]} : vector<4x290xf32> to vector<4x256xf32>
    %c3 = arith.constant 3 : index
    %c0_24 = arith.constant 0 : index
    %c0_25 = arith.constant 0 : index
    %124 = vector.load %arg5[%c3, %c0_24, %c0_25] : memref<9x4x4xf32, #tpu.memory_space<vmem>>, vector<1x4x4xf32>
    %125 = vector.shape_cast %124 : vector<1x4x4xf32> to vector<4x4xf32>
    %126 = vector.extract_strided_slice %125 {offsets = [0, 0], sizes = [4, 1], strides = [1, 1]} : vector<4x4xf32> to vector<4x1xf32>
    %127 = vector.extract_strided_slice %123 {offsets = [0, 0], sizes = [1, 256], strides = [1, 1]} : vector<4x256xf32> to vector<1x256xf32>
    %128 = vector.broadcast %126 : vector<4x1xf32> to vector<4x256xf32>
    %129 = vector.broadcast %127 : vector<1x256xf32> to vector<4x256xf32>
    %130 = arith.mulf %128, %129 : vector<4x256xf32>
    %131 = arith.addf %122, %130 : vector<4x256xf32>
    %132 = vector.extract_strided_slice %125 {offsets = [0, 1], sizes = [4, 1], strides = [1, 1]} : vector<4x4xf32> to vector<4x1xf32>
    %133 = vector.extract_strided_slice %123 {offsets = [1, 0], sizes = [1, 256], strides = [1, 1]} : vector<4x256xf32> to vector<1x256xf32>
    %134 = vector.broadcast %132 : vector<4x1xf32> to vector<4x256xf32>
    %135 = vector.broadcast %133 : vector<1x256xf32> to vector<4x256xf32>
    %136 = arith.mulf %134, %135 : vector<4x256xf32>
    %137 = arith.addf %131, %136 : vector<4x256xf32>
    %138 = vector.extract_strided_slice %125 {offsets = [0, 2], sizes = [4, 1], strides = [1, 1]} : vector<4x4xf32> to vector<4x1xf32>
    %139 = vector.extract_strided_slice %123 {offsets = [2, 0], sizes = [1, 256], strides = [1, 1]} : vector<4x256xf32> to vector<1x256xf32>
    %140 = vector.broadcast %138 : vector<4x1xf32> to vector<4x256xf32>
    %141 = vector.broadcast %139 : vector<1x256xf32> to vector<4x256xf32>
    %142 = arith.mulf %140, %141 : vector<4x256xf32>
    %143 = arith.addf %137, %142 : vector<4x256xf32>
    %144 = vector.extract_strided_slice %125 {offsets = [0, 3], sizes = [4, 1], strides = [1, 1]} : vector<4x4xf32> to vector<4x1xf32>
    %145 = vector.extract_strided_slice %123 {offsets = [3, 0], sizes = [1, 256], strides = [1, 1]} : vector<4x256xf32> to vector<1x256xf32>
    %146 = vector.broadcast %144 : vector<4x1xf32> to vector<4x256xf32>
    %147 = vector.broadcast %145 : vector<1x256xf32> to vector<4x256xf32>
    %148 = arith.mulf %146, %147 : vector<4x256xf32>
    %149 = arith.addf %143, %148 : vector<4x256xf32>
    %c4 = arith.constant 4 : index
    %c0_26 = arith.constant 0 : index
    %c0_27 = arith.constant 0 : index
    %150 = vector.load %arg5[%c4, %c0_26, %c0_27] : memref<9x4x4xf32, #tpu.memory_space<vmem>>, vector<1x4x4xf32>
    %151 = vector.shape_cast %150 : vector<1x4x4xf32> to vector<4x4xf32>
    %152 = vector.extract_strided_slice %151 {offsets = [0, 0], sizes = [4, 1], strides = [1, 1]} : vector<4x4xf32> to vector<4x1xf32>
    %153 = vector.extract_strided_slice %1 {offsets = [0, 0], sizes = [1, 256], strides = [1, 1]} : vector<4x256xf32> to vector<1x256xf32>
    %154 = vector.broadcast %152 : vector<4x1xf32> to vector<4x256xf32>
    %155 = vector.broadcast %153 : vector<1x256xf32> to vector<4x256xf32>
    %156 = arith.mulf %154, %155 : vector<4x256xf32>
    %157 = arith.addf %149, %156 : vector<4x256xf32>
    %158 = vector.extract_strided_slice %151 {offsets = [0, 1], sizes = [4, 1], strides = [1, 1]} : vector<4x4xf32> to vector<4x1xf32>
    %159 = vector.extract_strided_slice %1 {offsets = [1, 0], sizes = [1, 256], strides = [1, 1]} : vector<4x256xf32> to vector<1x256xf32>
    %160 = vector.broadcast %158 : vector<4x1xf32> to vector<4x256xf32>
    %161 = vector.broadcast %159 : vector<1x256xf32> to vector<4x256xf32>
    %162 = arith.mulf %160, %161 : vector<4x256xf32>
    %163 = arith.addf %157, %162 : vector<4x256xf32>
    %164 = vector.extract_strided_slice %151 {offsets = [0, 2], sizes = [4, 1], strides = [1, 1]} : vector<4x4xf32> to vector<4x1xf32>
    %165 = vector.extract_strided_slice %1 {offsets = [2, 0], sizes = [1, 256], strides = [1, 1]} : vector<4x256xf32> to vector<1x256xf32>
    %166 = vector.broadcast %164 : vector<4x1xf32> to vector<4x256xf32>
    %167 = vector.broadcast %165 : vector<1x256xf32> to vector<4x256xf32>
    %168 = arith.mulf %166, %167 : vector<4x256xf32>
    %169 = arith.addf %163, %168 : vector<4x256xf32>
    %170 = vector.extract_strided_slice %151 {offsets = [0, 3], sizes = [4, 1], strides = [1, 1]} : vector<4x4xf32> to vector<4x1xf32>
    %171 = vector.extract_strided_slice %1 {offsets = [3, 0], sizes = [1, 256], strides = [1, 1]} : vector<4x256xf32> to vector<1x256xf32>
    %172 = vector.broadcast %170 : vector<4x1xf32> to vector<4x256xf32>
    %173 = vector.broadcast %171 : vector<1x256xf32> to vector<4x256xf32>
    %174 = arith.mulf %172, %173 : vector<4x256xf32>
    %175 = arith.addf %169, %174 : vector<4x256xf32>
    %176 = vector.extract_strided_slice %40 {offsets = [0, 18], sizes = [4, 256], strides = [1, 1]} : vector<4x290xf32> to vector<4x256xf32>
    %c5 = arith.constant 5 : index
    %c0_28 = arith.constant 0 : index
    %c0_29 = arith.constant 0 : index
    %177 = vector.load %arg5[%c5, %c0_28, %c0_29] : memref<9x4x4xf32, #tpu.memory_space<vmem>>, vector<1x4x4xf32>
    %178 = vector.shape_cast %177 : vector<1x4x4xf32> to vector<4x4xf32>
    %179 = vector.extract_strided_slice %178 {offsets = [0, 0], sizes = [4, 1], strides = [1, 1]} : vector<4x4xf32> to vector<4x1xf32>
    %180 = vector.extract_strided_slice %176 {offsets = [0, 0], sizes = [1, 256], strides = [1, 1]} : vector<4x256xf32> to vector<1x256xf32>
    %181 = vector.broadcast %179 : vector<4x1xf32> to vector<4x256xf32>
    %182 = vector.broadcast %180 : vector<1x256xf32> to vector<4x256xf32>
    %183 = arith.mulf %181, %182 : vector<4x256xf32>
    %184 = arith.addf %175, %183 : vector<4x256xf32>
    %185 = vector.extract_strided_slice %178 {offsets = [0, 1], sizes = [4, 1], strides = [1, 1]} : vector<4x4xf32> to vector<4x1xf32>
    %186 = vector.extract_strided_slice %176 {offsets = [1, 0], sizes = [1, 256], strides = [1, 1]} : vector<4x256xf32> to vector<1x256xf32>
    %187 = vector.broadcast %185 : vector<4x1xf32> to vector<4x256xf32>
    %188 = vector.broadcast %186 : vector<1x256xf32> to vector<4x256xf32>
    %189 = arith.mulf %187, %188 : vector<4x256xf32>
    %190 = arith.addf %184, %189 : vector<4x256xf32>
    %191 = vector.extract_strided_slice %178 {offsets = [0, 2], sizes = [4, 1], strides = [1, 1]} : vector<4x4xf32> to vector<4x1xf32>
    %192 = vector.extract_strided_slice %176 {offsets = [2, 0], sizes = [1, 256], strides = [1, 1]} : vector<4x256xf32> to vector<1x256xf32>
    %193 = vector.broadcast %191 : vector<4x1xf32> to vector<4x256xf32>
    %194 = vector.broadcast %192 : vector<1x256xf32> to vector<4x256xf32>
    %195 = arith.mulf %193, %194 : vector<4x256xf32>
    %196 = arith.addf %190, %195 : vector<4x256xf32>
    %197 = vector.extract_strided_slice %178 {offsets = [0, 3], sizes = [4, 1], strides = [1, 1]} : vector<4x4xf32> to vector<4x1xf32>
    %198 = vector.extract_strided_slice %176 {offsets = [3, 0], sizes = [1, 256], strides = [1, 1]} : vector<4x256xf32> to vector<1x256xf32>
    %199 = vector.broadcast %197 : vector<4x1xf32> to vector<4x256xf32>
    %200 = vector.broadcast %198 : vector<1x256xf32> to vector<4x256xf32>
    %201 = arith.mulf %199, %200 : vector<4x256xf32>
    %202 = arith.addf %196, %201 : vector<4x256xf32>
    %203 = vector.extract_strided_slice %35 {offsets = [0, 32], sizes = [4, 256], strides = [1, 1]} : vector<4x290xf32> to vector<4x256xf32>
    %c6 = arith.constant 6 : index
    %c0_30 = arith.constant 0 : index
    %c0_31 = arith.constant 0 : index
    %204 = vector.load %arg5[%c6, %c0_30, %c0_31] : memref<9x4x4xf32, #tpu.memory_space<vmem>>, vector<1x4x4xf32>
    %205 = vector.shape_cast %204 : vector<1x4x4xf32> to vector<4x4xf32>
    %206 = vector.extract_strided_slice %205 {offsets = [0, 0], sizes = [4, 1], strides = [1, 1]} : vector<4x4xf32> to vector<4x1xf32>
    %207 = vector.extract_strided_slice %203 {offsets = [0, 0], sizes = [1, 256], strides = [1, 1]} : vector<4x256xf32> to vector<1x256xf32>
    %208 = vector.broadcast %206 : vector<4x1xf32> to vector<4x256xf32>
    %209 = vector.broadcast %207 : vector<1x256xf32> to vector<4x256xf32>
    %210 = arith.mulf %208, %209 : vector<4x256xf32>
    %211 = arith.addf %202, %210 : vector<4x256xf32>
    %212 = vector.extract_strided_slice %205 {offsets = [0, 1], sizes = [4, 1], strides = [1, 1]} : vector<4x4xf32> to vector<4x1xf32>
    %213 = vector.extract_strided_slice %203 {offsets = [1, 0], sizes = [1, 256], strides = [1, 1]} : vector<4x256xf32> to vector<1x256xf32>
    %214 = vector.broadcast %212 : vector<4x1xf32> to vector<4x256xf32>
    %215 = vector.broadcast %213 : vector<1x256xf32> to vector<4x256xf32>
    %216 = arith.mulf %214, %215 : vector<4x256xf32>
    %217 = arith.addf %211, %216 : vector<4x256xf32>
    %218 = vector.extract_strided_slice %205 {offsets = [0, 2], sizes = [4, 1], strides = [1, 1]} : vector<4x4xf32> to vector<4x1xf32>
    %219 = vector.extract_strided_slice %203 {offsets = [2, 0], sizes = [1, 256], strides = [1, 1]} : vector<4x256xf32> to vector<1x256xf32>
    %220 = vector.broadcast %218 : vector<4x1xf32> to vector<4x256xf32>
    %221 = vector.broadcast %219 : vector<1x256xf32> to vector<4x256xf32>
    %222 = arith.mulf %220, %221 : vector<4x256xf32>
    %223 = arith.addf %217, %222 : vector<4x256xf32>
    %224 = vector.extract_strided_slice %205 {offsets = [0, 3], sizes = [4, 1], strides = [1, 1]} : vector<4x4xf32> to vector<4x1xf32>
    %225 = vector.extract_strided_slice %203 {offsets = [3, 0], sizes = [1, 256], strides = [1, 1]} : vector<4x256xf32> to vector<1x256xf32>
    %226 = vector.broadcast %224 : vector<4x1xf32> to vector<4x256xf32>
    %227 = vector.broadcast %225 : vector<1x256xf32> to vector<4x256xf32>
    %228 = arith.mulf %226, %227 : vector<4x256xf32>
    %229 = arith.addf %223, %228 : vector<4x256xf32>
    %230 = vector.extract_strided_slice %12 {offsets = [0, 33], sizes = [4, 256], strides = [1, 1]} : vector<4x290xf32> to vector<4x256xf32>
    %c7 = arith.constant 7 : index
    %c0_32 = arith.constant 0 : index
    %c0_33 = arith.constant 0 : index
    %231 = vector.load %arg5[%c7, %c0_32, %c0_33] : memref<9x4x4xf32, #tpu.memory_space<vmem>>, vector<1x4x4xf32>
    %232 = vector.shape_cast %231 : vector<1x4x4xf32> to vector<4x4xf32>
    %233 = vector.extract_strided_slice %232 {offsets = [0, 0], sizes = [4, 1], strides = [1, 1]} : vector<4x4xf32> to vector<4x1xf32>
    %234 = vector.extract_strided_slice %230 {offsets = [0, 0], sizes = [1, 256], strides = [1, 1]} : vector<4x256xf32> to vector<1x256xf32>
    %235 = vector.broadcast %233 : vector<4x1xf32> to vector<4x256xf32>
    %236 = vector.broadcast %234 : vector<1x256xf32> to vector<4x256xf32>
    %237 = arith.mulf %235, %236 : vector<4x256xf32>
    %238 = arith.addf %229, %237 : vector<4x256xf32>
    %239 = vector.extract_strided_slice %232 {offsets = [0, 1], sizes = [4, 1], strides = [1, 1]} : vector<4x4xf32> to vector<4x1xf32>
    %240 = vector.extract_strided_slice %230 {offsets = [1, 0], sizes = [1, 256], strides = [1, 1]} : vector<4x256xf32> to vector<1x256xf32>
    %241 = vector.broadcast %239 : vector<4x1xf32> to vector<4x256xf32>
    %242 = vector.broadcast %240 : vector<1x256xf32> to vector<4x256xf32>
    %243 = arith.mulf %241, %242 : vector<4x256xf32>
    %244 = arith.addf %238, %243 : vector<4x256xf32>
    %245 = vector.extract_strided_slice %232 {offsets = [0, 2], sizes = [4, 1], strides = [1, 1]} : vector<4x4xf32> to vector<4x1xf32>
    %246 = vector.extract_strided_slice %230 {offsets = [2, 0], sizes = [1, 256], strides = [1, 1]} : vector<4x256xf32> to vector<1x256xf32>
    %247 = vector.broadcast %245 : vector<4x1xf32> to vector<4x256xf32>
    %248 = vector.broadcast %246 : vector<1x256xf32> to vector<4x256xf32>
    %249 = arith.mulf %247, %248 : vector<4x256xf32>
    %250 = arith.addf %244, %249 : vector<4x256xf32>
    %251 = vector.extract_strided_slice %232 {offsets = [0, 3], sizes = [4, 1], strides = [1, 1]} : vector<4x4xf32> to vector<4x1xf32>
    %252 = vector.extract_strided_slice %230 {offsets = [3, 0], sizes = [1, 256], strides = [1, 1]} : vector<4x256xf32> to vector<1x256xf32>
    %253 = vector.broadcast %251 : vector<4x1xf32> to vector<4x256xf32>
    %254 = vector.broadcast %252 : vector<1x256xf32> to vector<4x256xf32>
    %255 = arith.mulf %253, %254 : vector<4x256xf32>
    %256 = arith.addf %250, %255 : vector<4x256xf32>
    %257 = vector.extract_strided_slice %40 {offsets = [0, 34], sizes = [4, 256], strides = [1, 1]} : vector<4x290xf32> to vector<4x256xf32>
    %c8 = arith.constant 8 : index
    %c0_34 = arith.constant 0 : index
    %c0_35 = arith.constant 0 : index
    %258 = vector.load %arg5[%c8, %c0_34, %c0_35] : memref<9x4x4xf32, #tpu.memory_space<vmem>>, vector<1x4x4xf32>
    %259 = vector.shape_cast %258 : vector<1x4x4xf32> to vector<4x4xf32>
    %260 = vector.extract_strided_slice %259 {offsets = [0, 0], sizes = [4, 1], strides = [1, 1]} : vector<4x4xf32> to vector<4x1xf32>
    %261 = vector.extract_strided_slice %257 {offsets = [0, 0], sizes = [1, 256], strides = [1, 1]} : vector<4x256xf32> to vector<1x256xf32>
    %262 = vector.broadcast %260 : vector<4x1xf32> to vector<4x256xf32>
    %263 = vector.broadcast %261 : vector<1x256xf32> to vector<4x256xf32>
    %264 = arith.mulf %262, %263 : vector<4x256xf32>
    %265 = arith.addf %256, %264 : vector<4x256xf32>
    %266 = vector.extract_strided_slice %259 {offsets = [0, 1], sizes = [4, 1], strides = [1, 1]} : vector<4x4xf32> to vector<4x1xf32>
    %267 = vector.extract_strided_slice %257 {offsets = [1, 0], sizes = [1, 256], strides = [1, 1]} : vector<4x256xf32> to vector<1x256xf32>
    %268 = vector.broadcast %266 : vector<4x1xf32> to vector<4x256xf32>
    %269 = vector.broadcast %267 : vector<1x256xf32> to vector<4x256xf32>
    %270 = arith.mulf %268, %269 : vector<4x256xf32>
    %271 = arith.addf %265, %270 : vector<4x256xf32>
    %272 = vector.extract_strided_slice %259 {offsets = [0, 2], sizes = [4, 1], strides = [1, 1]} : vector<4x4xf32> to vector<4x1xf32>
    %273 = vector.extract_strided_slice %257 {offsets = [2, 0], sizes = [1, 256], strides = [1, 1]} : vector<4x256xf32> to vector<1x256xf32>
    %274 = vector.broadcast %272 : vector<4x1xf32> to vector<4x256xf32>
    %275 = vector.broadcast %273 : vector<1x256xf32> to vector<4x256xf32>
    %276 = arith.mulf %274, %275 : vector<4x256xf32>
    %277 = arith.addf %271, %276 : vector<4x256xf32>
    %278 = vector.extract_strided_slice %259 {offsets = [0, 3], sizes = [4, 1], strides = [1, 1]} : vector<4x4xf32> to vector<4x1xf32>
    %279 = vector.extract_strided_slice %257 {offsets = [3, 0], sizes = [1, 256], strides = [1, 1]} : vector<4x256xf32> to vector<1x256xf32>
    %280 = vector.broadcast %278 : vector<4x1xf32> to vector<4x256xf32>
    %281 = vector.broadcast %279 : vector<1x256xf32> to vector<4x256xf32>
    %282 = arith.mulf %280, %281 : vector<4x256xf32>
    %283 = arith.addf %277, %282 : vector<4x256xf32>
    %c0_36 = arith.constant 0 : index
    %c0_37 = arith.constant 0 : index
    %284 = vector.load %arg6[%c0_36, %c0_37] : memref<4x1xf32, #tpu.memory_space<vmem>>, vector<4x1xf32>
    %285 = vector.broadcast %284 : vector<4x1xf32> to vector<4x256xf32>
    %286 = arith.addf %283, %285 : vector<4x256xf32>
    %287 = arith.addf %286, %1 : vector<4x256xf32>
    %288 = vector.shape_cast %287 : vector<4x256xf32> to vector<1x4x256xf32>
    %c0_38 = arith.constant 0 : index
    %c0_39 = arith.constant 0 : index
    %c0_40 = arith.constant 0 : index
    %289 = vector.load %arg7[%c0_38, %c0_39, %c0_40] : memref<1x4x256xf32, #tpu.memory_space<vmem>>, vector<1x4x256xf32>
    tpu.vector_store %arg7[%c0_38, %c0_39, %c0_40], %288 {strides = array<i32>} : memref<1x4x256xf32, #tpu.memory_space<vmem>>, vector<1x4x256xf32>,
    return
  }
  func.func @transform_0(%arg0: i32, %arg1: i32) -> (i32, i32, i32) {
    %c0_i32 = arith.constant 0 : i32
    %c0_i32_0 = arith.constant 0 : i32
    return %arg0, %c0_i32, %arg1 : i32, i32, i32
  }
  func.func @transform_1(%arg0: i32, %arg1: i32) -> (i32, i32, i32) {
    %c2_i32 = arith.constant 2 : i32
    %0 = arith.muli %arg1, %c2_i32 : i32
    %c1_i32 = arith.constant 1 : i32
    %1 = arith.subi %0, %c1_i32 : i32
    %c0_i32 = arith.constant 0 : i32
    %2 = arith.maxsi %1, %c0_i32 : i32
    %c0_i32_0 = arith.constant 0 : i32
    %c0_i32_1 = arith.constant 0 : i32
    return %arg0, %c0_i32_0, %2 : i32, i32, i32
  }
  func.func @transform_2(%arg0: i32, %arg1: i32) -> (i32, i32, i32) {
    %c1_i32 = arith.constant 1 : i32
    %0 = arith.addi %arg1, %c1_i32 : i32
    %c2_i32 = arith.constant 2 : i32
    %1 = arith.muli %0, %c2_i32 : i32
    %c1_i32_0 = arith.constant 1 : i32
    %2 = arith.minsi %1, %c1_i32_0 : i32
    %c0_i32 = arith.constant 0 : i32
    %c0_i32_1 = arith.constant 0 : i32
    return %arg0, %c0_i32, %2 : i32, i32, i32
  }
  func.func @transform_3(%arg0: i32, %arg1: i32) -> (i32, i32, i32) {
    %c0_i32 = arith.constant 0 : i32
    %c0_i32_0 = arith.constant 0 : i32
    %c0_i32_1 = arith.constant 0 : i32
    %c0_i32_2 = arith.constant 0 : i32
    return %c0_i32, %c0_i32_0, %c0_i32_1 : i32, i32, i32
  }
  func.func @transform_4(%arg0: i32, %arg1: i32) -> (i32, i32) {
    %c0_i32 = arith.constant 0 : i32
    %c0_i32_0 = arith.constant 0 : i32
    %c0_i32_1 = arith.constant 0 : i32
    return %c0_i32, %c0_i32_0 : i32, i32
  }
  func.func @transform_5(%arg0: i32, %arg1: i32) -> (i32, i32, i32) {
    %c0_i32 = arith.constant 0 : i32
    %c0_i32_0 = arith.constant 0 : i32
    return %arg0, %c0_i32, %arg1 : i32, i32, i32
  }
}

</mosaic_0001>

<llo_original>
// kernel: tpu_custom_call.1
$region0: #{tpu_custom_call.1}
  #allocation0 [shape = 'u32[]', space=smem, size = 0x4, offset = 0x4, fixed_abs, tag = 'smem constant byte address 0x4 - core index']
  #allocation1 [shape = 'u32[144,128]{1,0:T(1,128)}', space=vmem, size = 0x12000, scoped, tag = 'internal scratch']
  %s0 = inlined_call_operand.vmem [shape: f32[2,4,256], index: 0, kind: input, shape index: {}]
  %s1 = inlined_call_operand.vmem [shape: f32[2,4,256], index: 1, kind: input, shape index: {}]
  %s2 = inlined_call_operand.vmem [shape: f32[2,4,256], index: 2, kind: input, shape index: {}]
  %s3 = inlined_call_operand.vmem [shape: f32[9,4,4], index: 3, kind: input, shape index: {}]
  %s4 = inlined_call_operand.vmem [shape: f32[4,1], index: 4, kind: input, shape index: {}]
  %s5 = inlined_call_operand.hbm [shape: f32[2,4,256], index: 5, kind: output, shape index: {}]
  %s6 = sld [smem:[#allocation0]]
  $region53: #{tpu_custom_call.1} parent=0
    _
  %s8 = ssub.s32 1, %s6
  %s9 = scalar_select 0, %s8, %s6
  $region1: #{tpu_custom_call.1} parent=0
    #allocation2 [shape = 'u8[8192]{0}', space=vmem, size = 0x2000, scoped, tag = 'output window, operand 0']
    #allocation3 [shape = 's32[2]{0}', space=sflag, size = 0x8, scoped, tag = 'scoped memory for tpu_custom_call.1']
    %10 = vsyncpa [#allocation3], 0
    %s11 = scalar_lea.sflag [#allocation3], 1
    %12 = vsyncpa %s11, 0
    loop: start=0, step=1, limit=4
    $region2: #{tpu_custom_call.1} parent=1 // loop_pre_header
      _
    $region3: #{tpu_custom_call.1} parent=1 // loop_header
      %s14 = sphi 0, %s18
      %p15 = scmp.ge.s32.totalorder %s14, 4
      %s21 = sphi 0, %s33
      %s22 = sphi 0, %s29
      %s23 = sphi 0, %s21
      %s24 = sphi 0, %s22
      %s25 = sphi 0, %s23
      %s26 = sphi 0, %s24
      %s38 = sphi 0, %s40
      %s41 = sphi 0, %s38
      %s42 = sphi 0, %s41
      %s58 = sphi 0, %s42
      %s74 = sphi 0, %s76
      %s77 = sphi 0, %s74
      %s78 = sphi 0, %s77
      %s94 = sphi 0, %s78
      %s110 = sphi 0, %s112
      %s113 = sphi 0, %s110
      %s114 = sphi 0, %s113
      %s130 = sphi 0, %s114
      %s134 = sphi 0, %s134
      %s136 = sphi 0, %s134
      %s137 = sphi 0, %s136
      %s151 = sphi 0, %s137
      %s155 = sphi 0, %s155
      %s157 = sphi 0, %s155
      %s158 = sphi 0, %s157
      %s172 = sphi 0, %s158
      %s180 = sphi 0, %s182
      %s183 = sphi 0, %s180
      %s184 = sphi 0, %s183
      %s200 = sphi 0, %s184
    $region4: #{tpu_custom_call.1} parent=1 // loop_header_branch
      %17 = sbr.rel (%p15) target = $region8
    $region5: #{tpu_custom_call.1} parent=1 // loop_body
      %s19 = ssub.s32 %s14, 1
      %s20 = ssub.s32 %s14, 2
      %s27 = sadd.s32 1, %s22
      %p28 = scmp.ge.s32.totalorder %s27, 1
      %s29 = scalar_select %p28, 0, %s27
      %s30 = sadd.s32 1, %s21
      %s31 = scalar_select %p28, %s30, %s21
      %p32 = scmp.ge.s32.totalorder %s31, 2
      %s33 = scalar_select %p32, 0, %s31
      %s34 = ssub.s32 %s21, %s33
      %s35 = ssub.s32 %s22, %s29
      %s36 = sor.u32 %s34, %s35
      %p37 = scmp.eq.s32.totalorder %s36, 0
      %s39 = sadd.s32 %s38, 1
      %s40 = scalar_select %p37, %s38, %s39
      %p43 = pneg %p37
      %p44 = scmp.eq.s32.totalorder %s14, 1
      %p45 = por %p43, %p44
      %p46 = scmp.ne.s32.totalorder %s38, %s41
      %p47 = scmp.eq.s32.totalorder %s14, 0
      %p48 = por %p46, %p47
      %p49 = scmp.ne.s32.totalorder %s38, %s41
      %p50 = scmp.eq.s32.totalorder %s19, 1
      %p51 = por %p49, %p50
      %p52 = scmp.ne.s32.totalorder %s41, %s42
      %p53 = scmp.eq.s32.totalorder %s19, 0
      %p54 = por %p52, %p53
      %p55 = scmp.ne.s32.totalorder %s41, %s42
      %p56 = scmp.eq.s32.totalorder %s20, 1
      %p57 = por %p55, %p56
      %p59 = scmp.ne.s32.totalorder %s42, %s58
      %p60 = scmp.eq.s32.totalorder %s20, 0
      %p61 = por %p59, %p60
      %s62 = smul.u32 %s22, 2
      %s63 = ssub.s32 %s62, 1
      %p64 = scmp.gt.s32.totalorder %s63, 0
      %s65 = scalar_select %p64, %s63, 0
      %s66 = smul.u32 %s29, 2
      %s67 = ssub.s32 %s66, 1
      %p68 = scmp.gt.s32.totalorder %s67, 0
      %s69 = scalar_select %p68, %s67, 0
      %s70 = ssub.s32 %s21, %s33
      %s71 = ssub.s32 %s65, %s69
      %s72 = sor.u32 %s70, %s71
      %p73 = scmp.eq.s32.totalorder %s72, 0
      %s75 = sadd.s32 %s74, 1
      %s76 = scalar_select %p73, %s74, %s75
      %p79 = pneg %p73
      %p80 = scmp.eq.s32.totalorder %s14, 1
      %p81 = por %p79, %p80
      %p82 = scmp.ne.s32.totalorder %s74, %s77
      %p83 = scmp.eq.s32.totalorder %s14, 0
      %p84 = por %p82, %p83
      %p85 = scmp.ne.s32.totalorder %s74, %s77
      %p86 = scmp.eq.s32.totalorder %s19, 1
      %p87 = por %p85, %p86
      %p88 = scmp.ne.s32.totalorder %s77, %s78
      %p89 = scmp.eq.s32.totalorder %s19, 0
      %p90 = por %p88, %p89
      %p91 = scmp.ne.s32.totalorder %s77, %s78
      %p92 = scmp.eq.s32.totalorder %s20, 1
      %p93 = por %p91, %p92
      %p95 = scmp.ne.s32.totalorder %s78, %s94
      %p96 = scmp.eq.s32.totalorder %s20, 0
      %p97 = por %p95, %p96
      %s98 = sadd.s32 %s22, 1
      %s99 = smul.u32 %s98, 2
      %p100 = scmp.lt.s32.totalorder %s99, 1
      %s101 = scalar_select %p100, %s99, 1
      %s102 = sadd.s32 %s29, 1
      %s103 = smul.u32 %s102, 2
      %p104 = scmp.lt.s32.totalorder %s103, 1
      %s105 = scalar_select %p104, %s103, 1
      %s106 = ssub.s32 %s21, %s33
      %s107 = ssub.s32 %s101, %s105
      %s108 = sor.u32 %s106, %s107
      %p109 = scmp.eq.s32.totalorder %s108, 0
      %s111 = sadd.s32 %s110, 1
      %s112 = scalar_select %p109, %s110, %s111
      %p115 = pneg %p109
      %p116 = scmp.eq.s32.totalorder %s14, 1
      %p117 = por %p115, %p116
      %p118 = scmp.ne.s32.totalorder %s110, %s113
      %p119 = scmp.eq.s32.totalorder %s14, 0
      %p120 = por %p118, %p119
      %p121 = scmp.ne.s32.totalorder %s110, %s113
      %p122 = scmp.eq.s32.totalorder %s19, 1
      %p123 = por %p121, %p122
      %p124 = scmp.ne.s32.totalorder %s113, %s114
      %p125 = scmp.eq.s32.totalorder %s19, 0
      %p126 = por %p124, %p125
      %p127 = scmp.ne.s32.totalorder %s113, %s114
      %p128 = scmp.eq.s32.totalorder %s20, 1
      %p129 = por %p127, %p128
      %p131 = scmp.ne.s32.totalorder %s114, %s130
      %p132 = scmp.eq.s32.totalorder %s20, 0
      %p133 = por %p131, %p132
      %s135 = sadd.s32 %s134, 1
      %p138 = scmp.eq.s32.totalorder %s14, 1
      %p139 = scmp.ne.s32.totalorder %s134, %s136
      %p140 = scmp.eq.s32.totalorder %s14, 0
      %p141 = por %p139, %p140
      %p142 = scmp.ne.s32.totalorder %s134, %s136
      %p143 = scmp.eq.s32.totalorder %s19, 1
      %p144 = por %p142, %p143
      %p145 = scmp.ne.s32.totalorder %s136, %s137
      %p146 = scmp.eq.s32.totalorder %s19, 0
      %p147 = por %p145, %p146
      %p148 = scmp.ne.s32.totalorder %s136, %s137
      %p149 = scmp.eq.s32.totalorder %s20, 1
      %p150 = por %p148, %p149
      %p152 = scmp.ne.s32.totalorder %s137, %s151
      %p153 = scmp.eq.s32.totalorder %s20, 0
      %p154 = por %p152, %p153
      %s156 = sadd.s32 %s155, 1
      %p159 = scmp.eq.s32.totalorder %s14, 1
      %p160 = scmp.ne.s32.totalorder %s155, %s157
      %p161 = scmp.eq.s32.totalorder %s14, 0
      %p162 = por %p160, %p161
      %p163 = scmp.ne.s32.totalorder %s155, %s157
      %p164 = scmp.eq.s32.totalorder %s19, 1
      %p165 = por %p163, %p164
      %p166 = scmp.ne.s32.totalorder %s157, %s158
      %p167 = scmp.eq.s32.totalorder %s19, 0
      %p168 = por %p166, %p167
      %p169 = scmp.ne.s32.totalorder %s157, %s158
      %p170 = scmp.eq.s32.totalorder %s20, 1
      %p171 = por %p169, %p170
      %p173 = scmp.ne.s32.totalorder %s158, %s172
      %p174 = scmp.eq.s32.totalorder %s20, 0
      %p175 = por %p173, %p174
      %s176 = ssub.s32 %s21, %s33
      %s177 = ssub.s32 %s22, %s29
      %s178 = sor.u32 %s176, %s177
      %p179 = scmp.eq.s32.totalorder %s178, 0
      %s181 = sadd.s32 %s180, 1
      %s182 = scalar_select %p179, %s180, %s181
      %p185 = pneg %p179
      %p186 = scmp.eq.s32.totalorder %s14, 1
      %p187 = por %p185, %p186
      %p188 = scmp.ne.s32.totalorder %s180, %s183
      %p189 = scmp.eq.s32.totalorder %s14, 0
      %p190 = por %p188, %p189
      %p191 = scmp.ne.s32.totalorder %s180, %s183
      %p192 = scmp.eq.s32.totalorder %s19, 1
      %p193 = por %p191, %p192
      %p194 = scmp.ne.s32.totalorder %s183, %s184
      %p195 = scmp.eq.s32.totalorder %s19, 0
      %p196 = por %p194, %p195
      %p197 = scmp.ne.s32.totalorder %s183, %s184
      %p198 = scmp.eq.s32.totalorder %s20, 1
      %p199 = por %p197, %p198
      %p201 = scmp.ne.s32.totalorder %s184, %s200
      %p202 = scmp.eq.s32.totalorder %s20, 0
      %p203 = por %p201, %p202
      %p204 = scmp.le.s32.totalorder 1, %s14
      %p205 = scmp.lt.s32.totalorder %s14, 3
      %p206 = pnand %p204, %p205
      %p207 = pneg %p206
      // Predicated region
      $region9: #{tpu_custom_call.1} parent=5 // pred_check
        _
      $region10: #{tpu_custom_call.1} parent=5 // pred_check_branch
        %209 = sbr.rel (%p206) target = $region12
      $region11: #{tpu_custom_call.1} parent=5 // pred_region
        %s210 = ssub.s32 %s14, 1
        // Predicated region
        $region13: #{tpu_custom_call.1} parent=11 // pred_check
          %p211 = pneg %p147
        $region14: #{tpu_custom_call.1} parent=11 // pred_check_branch
          %213 = sbr.rel (%p211) target = $region16
        $region15: #{tpu_custom_call.1} parent=11 // pred_region
          _
        $region16: #{tpu_custom_call.1} parent=11 // pred_fallthru
          _
        // Predicated region
        $region17: #{tpu_custom_call.1} parent=11 // pred_check
          %p214 = pneg %p168
        $region18: #{tpu_custom_call.1} parent=11 // pred_check_branch
          %216 = sbr.rel (%p214) target = $region20
        $region19: #{tpu_custom_call.1} parent=11 // pred_region
          _
        $region20: #{tpu_custom_call.1} parent=11 // pred_fallthru
          _
      $region12: #{tpu_custom_call.1} parent=5 // pred_fallthru
        _
      %p217 = scmp.lt.s32.totalorder %s14, 2
      // Predicated region
      $region21: #{tpu_custom_call.1} parent=5 // pred_check
        %p218 = pneg %p217
      $region22: #{tpu_custom_call.1} parent=5 // pred_check_branch
        %220 = sbr.rel (%p218) target = $region24
      $region23: #{tpu_custom_call.1} parent=5 // pred_region
        // Predicated region
        $region25: #{tpu_custom_call.1} parent=23 // pred_check
          %p221 = pneg %p48
        $region26: #{tpu_custom_call.1} parent=23 // pred_check_branch
          %223 = sbr.rel (%p221) target = $region28
        $region27: #{tpu_custom_call.1} parent=23 // pred_region
          %s224 = smul.u32 2, %s22
          %p225 = scmp.lt.s32.totalorder %s21, 1
          %s226 = scalar_select %p225, %s21, 1
          %p227 = scmp.lt.s32.totalorder %s224, 1
          %s228 = scalar_select %p227, %s224, 1
          %s229 = smul.addr %s226, 2
          %s230 = sadd.s32 %s228, %s229
          %s231 = smul.addr %s230, 4
          %s232 = scalar_lea.vmem %s0, %s231
          %s233 = smul.u32 2, %s22
        $region28: #{tpu_custom_call.1} parent=23 // pred_fallthru
          _
        // Predicated region
        $region29: #{tpu_custom_call.1} parent=23 // pred_check
          %p234 = pneg %p84
        $region30: #{tpu_custom_call.1} parent=23 // pred_check_branch
          %236 = sbr.rel (%p234) target = $region32
        $region31: #{tpu_custom_call.1} parent=23 // pred_region
          %s237 = smul.u32 %s22, 2
          %s238 = ssub.s32 %s237, 1
          %p239 = scmp.gt.s32.totalorder %s238, 0
          %s240 = scalar_select %p239, %s238, 0
          %p241 = scmp.lt.s32.totalorder %s21, 1
          %s242 = scalar_select %p241, %s21, 1
          %p243 = scmp.lt.s32.totalorder %s240, 1
          %s244 = scalar_select %p243, %s240, 1
          %s245 = smul.addr %s242, 2
          %s246 = sadd.s32 %s244, %s245
          %s247 = smul.addr %s246, 4
          %s248 = scalar_lea.vmem %s1, %s247
          %s249 = smul.u32 %s22, 2
          %s250 = ssub.s32 %s249, 1
          %p251 = scmp.gt.s32.totalorder %s250, 0
          %s252 = scalar_select %p251, %s250, 0
        $region32: #{tpu_custom_call.1} parent=23 // pred_fallthru
          _
        // Predicated region
        $region33: #{tpu_custom_call.1} parent=23 // pred_check
          %p253 = pneg %p120
        $region34: #{tpu_custom_call.1} parent=23 // pred_check_branch
          %255 = sbr.rel (%p253) target = $region36
        $region35: #{tpu_custom_call.1} parent=23 // pred_region
          %s256 = sadd.s32 %s22, 1
          %s257 = smul.u32 %s256, 2
          %p258 = scmp.lt.s32.totalorder %s257, 1
          %s259 = scalar_select %p258, %s257, 1
          %p260 = scmp.lt.s32.totalorder %s21, 1
          %s261 = scalar_select %p260, %s21, 1
          %p262 = scmp.lt.s32.totalorder %s259, 1
          %s263 = scalar_select %p262, %s259, 1
          %s264 = smul.addr %s261, 2
          %s265 = sadd.s32 %s263, %s264
          %s266 = smul.addr %s265, 4
          %s267 = scalar_lea.vmem %s2, %s266
          %s268 = sadd.s32 %s22, 1
          %s269 = smul.u32 %s268, 2
          %p270 = scmp.lt.s32.totalorder %s269, 1
          %s271 = scalar_select %p270, %s269, 1
        $region36: #{tpu_custom_call.1} parent=23 // pred_fallthru
          _
      $region24: #{tpu_custom_call.1} parent=5 // pred_fallthru
        _
      %p272 = scmp.le.s32.totalorder 1, %s14
      %p273 = scmp.lt.s32.totalorder %s14, 3
      %p274 = pnand %p272, %p273
      %p275 = pneg %p274
      // Predicated region
      $region37: #{tpu_custom_call.1} parent=5 // pred_check
        _
      $region38: #{tpu_custom_call.1} parent=5 // pred_check_branch
        %277 = sbr.rel (%p274) target = $region40
      $region39: #{tpu_custom_call.1} parent=5 // pred_region
        %s278 = ssub.s32 %s14, 1
        %s279 = smul.u32 2, %s24
        %p280 = scmp.lt.s32.totalorder %s23, 1
        %s281 = scalar_select %p280, %s23, 1
        %p282 = scmp.lt.s32.totalorder %s279, 1
        %s283 = scalar_select %p282, %s279, 1
        %s284 = smul.addr %s281, 2
        %s285 = sadd.s32 %s283, %s284
        %s286 = smul.addr %s285, 4
        %s287 = scalar_lea.vmem %s0, %s286
        %p288 = pneg %p54
        %p289 = pneg %p51
        %s290 = smul.u32 %s24, 2
        %s291 = ssub.s32 %s290, 1
        %p292 = scmp.gt.s32.totalorder %s291, 0
        %s293 = scalar_select %p292, %s291, 0
        %p294 = scmp.lt.s32.totalorder %s23, 1
        %s295 = scalar_select %p294, %s23, 1
        %p296 = scmp.lt.s32.totalorder %s293, 1
        %s297 = scalar_select %p296, %s293, 1
        %s298 = smul.addr %s295, 2
        %s299 = sadd.s32 %s297, %s298
        %s300 = smul.addr %s299, 4
        %s301 = scalar_lea.vmem %s1, %s300
        %p302 = pneg %p90
        %p303 = pneg %p87
        %s304 = sadd.s32 %s24, 1
        %s305 = smul.u32 %s304, 2
        %p306 = scmp.lt.s32.totalorder %s305, 1
        %s307 = scalar_select %p306, %s305, 1
        %p308 = scmp.lt.s32.totalorder %s23, 1
        %s309 = scalar_select %p308, %s23, 1
        %p310 = scmp.lt.s32.totalorder %s307, 1
        %s311 = scalar_select %p310, %s307, 1
        %s312 = smul.addr %s309, 2
        %s313 = sadd.s32 %s311, %s312
        %s314 = smul.addr %s313, 4
        %s315 = scalar_lea.vmem %s2, %s314
        %p316 = pneg %p126
        %p317 = pneg %p123
        %p318 = pneg %p147
        %p319 = pneg %p144
        %p320 = pneg %p168
        %p321 = pneg %p165
        %p322 = pneg %p196
        %p323 = pneg %p193
        %s324 = sand.u32 %s183, 1
        %s325 = scalar_lea.sflag [#allocation3], %s324
        %s326 = sand.u32 %s183, 1
        %s327 = smul.addr %s326, 8
        %s328 = scalar_lea.vmem [#allocation2], %s327
        %s329 = smul.u32 2, %s24
        %p330 = scmp.lt.s32.totalorder %s23, 1
        %s331 = scalar_select %p330, %s23, 1
        %p332 = scmp.lt.s32.totalorder %s329, 1
        %s333 = scalar_select %p332, %s329, 1
        %s334 = smul.addr %s331, 2
        %s335 = sadd.s32 %s333, %s334
        %s336 = smul.addr %s335, 4
        %s337 = scalar_lea.vmem %s0, %s336
        %s338 = smul.u32 2, %s24
        %s339 = smul.u32 %s24, 2
        %s340 = ssub.s32 %s339, 1
        %p341 = scmp.gt.s32.totalorder %s340, 0
        %s342 = scalar_select %p341, %s340, 0
        %p343 = scmp.lt.s32.totalorder %s23, 1
        %s344 = scalar_select %p343, %s23, 1
        %p345 = scmp.lt.s32.totalorder %s342, 1
        %s346 = scalar_select %p345, %s342, 1
        %s347 = smul.addr %s344, 2
        %s348 = sadd.s32 %s346, %s347
        %s349 = smul.addr %s348, 4
        %s350 = scalar_lea.vmem %s1, %s349
        %s351 = smul.u32 %s24, 2
        %s352 = ssub.s32 %s351, 1
        %p353 = scmp.gt.s32.totalorder %s352, 0
        %s354 = scalar_select %p353, %s352, 0
        %s355 = sadd.s32 %s24, 1
        %s356 = smul.u32 %s355, 2
        %p357 = scmp.lt.s32.totalorder %s356, 1
        %s358 = scalar_select %p357, %s356, 1
        %p359 = scmp.lt.s32.totalorder %s23, 1
        %s360 = scalar_select %p359, %s23, 1
        %p361 = scmp.lt.s32.totalorder %s358, 1
        %s362 = scalar_select %p361, %s358, 1
        %s363 = smul.addr %s360, 2
        %s364 = sadd.s32 %s362, %s363
        %s365 = smul.addr %s364, 4
        %s366 = scalar_lea.vmem %s2, %s365
        %s367 = sadd.s32 %s24, 1
        %s368 = smul.u32 %s367, 2
        %p369 = scmp.lt.s32.totalorder %s368, 1
        %s370 = scalar_select %p369, %s368, 1
        %s371 = smul.u32 2, %s24
        %v372 = vld [vmem:[%s337] sm:$0xff]
        %v373 = vld [vmem:[%s350] sm:$0xf]
        %v374 = vld [vmem:[%s366] sm:$0xf]
        %p375 = scmp.gt.s32.totalorder %s24, 0
        %s376 = scalar_select %p375, 1, 0
        %v377 = vstv %s376
        %vm378 = vcmp.eq.s32.totalorder %v377, 1
        %v379 = vsel %vm378, %v373, 0.0
        %p380 = scmp.lt.s32.totalorder %s24, 0
        %s381 = scalar_select %p380, 1, 0
        %v382 = vstv %s381
        %vm383 = vcmp.eq.s32.totalorder %v382, 1
        %v384 = vsel %vm383, %v374, 0.0
        %386 = vrot.lane.b32.xlu0 %v379, 17
        %v387 = vpop.permute.xlu0 %386
        %v390 = vcombine.high %v372, %v372
        %391 = vrot.lane.b32.xlu0 %v372, 17
        %v392 = vpop.permute.xlu0 %391
        %393 = vrot.lane.b32.xlu0 %v390, 17
        %v394 = vpop.permute.xlu0 %393
        %vm395 = vcmask 138240
        %v396 = vsel %vm395, %v392, %v394
        %401 = vrot.lane.b32.xlu0 %v384, 17
        %v402 = vpop.permute.xlu0 %401
        %v404 = vsel %vm395, %v387, %v392
        %v405 = vsel %vm395, %v394, %v402
        %v406 = vlaneseq
        %v407 = vand.u32 %v406, 127
        %v408 = vadd.s32 %v407, 128
        %v409 = vadd.s32 %v407, 256
        %vm410 = vcmp.lt.s32.totalorder %v407, 0
        %v411 = vsub.s32 0, %v407
        %v412 = vsel %vm410, %v411, %v407
        %v413 = vshrl.u32 %v412, 4
        %v414 = vand.u32 %v412, 15
        %v415 = vsub.s32 0, %v414
        %v416 = vsel %vm410, %v415, %v414
        %vm417 = vcmp.lt.s32.totalorder %v408, 0
        %v418 = vsub.s32 0, %v408
        %v419 = vsel %vm417, %v418, %v408
        %v420 = vshrl.u32 %v419, 4
        %v421 = vand.u32 %v419, 15
        %v422 = vsub.s32 0, %v421
        %v423 = vsel %vm417, %v422, %v421
        %vm424 = vcmp.lt.s32.totalorder %v409, 0
        %v425 = vsub.s32 0, %v409
        %v426 = vsel %vm424, %v425, %v409
        %v427 = vshrl.u32 %v426, 4
        %v428 = vand.u32 %v426, 15
        %v429 = vsub.s32 0, %v428
        %v430 = vsel %vm424, %v429, %v428
        %vm431 = vcmp.ne.s32.totalorder %v416, 0
        %vm432 = vcmp.ne.s32.totalorder %v423, 0
        %vm433 = vcmp.ne.s32.totalorder %v430, 0
        %vm434 = vcmp.lt.s32.totalorder %v416, 0
        %vm435 = vcmp.lt.s32.totalorder %v423, 0
        %vm436 = vcmp.lt.s32.totalorder %v430, 0
        %vm437 = vmand %vm434, %vm431
        %vm438 = vmand %vm435, %vm432
        %vm439 = vmand %vm436, %vm433
        %v440 = vadd.s32 %v416, 16
        %v441 = vadd.s32 %v423, 16
        %v442 = vadd.s32 %v430, 16
        %v443 = vsel %vm437, %v440, %v416
        %v444 = vsel %vm438, %v441, %v423
        %v445 = vsel %vm439, %v442, %v430
        %vm446 = vcmp.ne.s32.totalorder %v443, 0
        %vm447 = vcmp.ne.s32.totalorder %v444, 0
        %vm448 = vcmp.ne.s32.totalorder %v445, 0
        %v449 = vsel %vm446, 1, 0
        %v450 = vsel %vm447, 1, 0
        %v451 = vsel %vm448, 1, 0
        %vm452 = vcmp.eq.s32.totalorder %v449, 1
        %vm453 = vcmp.eq.s32.totalorder %v450, 1
        %vm454 = vcmp.eq.s32.totalorder %v451, 1
        %v455 = vsel %vm452, %v404, 0.0
        %v456 = vsel %vm453, %v396, 0.0
        %v457 = vsel %vm454, %v405, 0.0
        %vm458 = vcmp.ne.s32.totalorder %v443, 1
        %vm459 = vcmp.ne.s32.totalorder %v444, 1
        %vm460 = vcmp.ne.s32.totalorder %v445, 1
        %v461 = vsel %vm458, 1, 0
        %v462 = vsel %vm459, 1, 0
        %v463 = vsel %vm460, 1, 0
        %vm464 = vcmp.eq.s32.totalorder %v461, 1
        %vm465 = vcmp.eq.s32.totalorder %v462, 1
        %vm466 = vcmp.eq.s32.totalorder %v463, 1
        %v467 = vsel %vm464, %v404, 0.0
        %v468 = vsel %vm465, %v396, 0.0
        %v469 = vsel %vm466, %v405, 0.0
        %v470 = vld [vmem:[%s3] sm:$0xf]
        %472 = vset.pattern.permute.xlu0 0
        %473 = vperm.xlu0 %472, %v470
        %v474 = vpop.permute.xlu0 %473
        %v476 = vlaneseq
        %v477 = vshrl.u32 %v476, 7
        %v478 = vsub.s32 0, %v477
        %v479 = vrot.slane %v455, %v478
        %v480 = vlaneseq
        %v481 = vshrl.u32 %v480, 7
        %v482 = vsub.s32 0, %v481
        %v483 = vrot.slane %v456, %v482
        %v484 = vmul.f32 %v474, %v479
        %v485 = vmul.f32 %v474, %v483
        %v486 = vadd.f32 %v484, 0.0
        %v487 = vadd.f32 %v485, 0.0
        %488 = vset.pattern.permute.xlu0 1
        %489 = vperm.xlu0 %488, %v470
        %v490 = vpop.permute.xlu0 %489
        %v492 = vlaneseq
        %v493 = vshrl.u32 %v492, 7
        %v494 = vsub.s32 1, %v493
        %v495 = vrot.slane %v455, %v494
        %v496 = vlaneseq
        %v497 = vshrl.u32 %v496, 7
        %v498 = vsub.s32 1, %v497
        %v499 = vrot.slane %v456, %v498
        %v500 = vmul.f32 %v490, %v495
        %v501 = vmul.f32 %v490, %v499
        %v502 = vadd.f32 %v486, %v500
        %v503 = vadd.f32 %v487, %v501
        %504 = vset.pattern.permute.xlu0 2
        %505 = vperm.xlu0 %504, %v470
        %v506 = vpop.permute.xlu0 %505
        %v508 = vlaneseq
        %v509 = vshrl.u32 %v508, 7
        %v510 = vsub.s32 2, %v509
        %v511 = vrot.slane %v455, %v510
        %v512 = vlaneseq
        %v513 = vshrl.u32 %v512, 7
        %v514 = vsub.s32 2, %v513
        %v515 = vrot.slane %v456, %v514
        %v516 = vmul.f32 %v506, %v511
        %v517 = vmul.f32 %v506, %v515
        %v518 = vadd.f32 %v502, %v516
        %v519 = vadd.f32 %v503, %v517
        %520 = vset.pattern.permute.xlu0 3
        %521 = vperm.xlu0 %520, %v470
        %v522 = vpop.permute.xlu0 %521
        %v524 = vlaneseq
        %v525 = vshrl.u32 %v524, 7
        %v526 = vsub.s32 3, %v525
        %v527 = vrot.slane %v455, %v526
        %v528 = vlaneseq
        %v529 = vshrl.u32 %v528, 7
        %v530 = vsub.s32 3, %v529
        %v531 = vrot.slane %v456, %v530
        %v532 = vmul.f32 %v522, %v527
        %v533 = vmul.f32 %v522, %v531
        %v534 = vadd.f32 %v518, %v532
        %v535 = vadd.f32 %v519, %v533
        %s536 = scalar_lea.vmem %s3, 4
        %v537 = vld [vmem:[%s536] sm:$0xf]
        %539 = vset.pattern.permute.xlu0 0
        %540 = vperm.xlu0 %539, %v537
        %v541 = vpop.permute.xlu0 %540
        %v543 = vlaneseq
        %v544 = vshrl.u32 %v543, 7
        %v545 = vsub.s32 0, %v544
        %v546 = vrot.slane %v404, %v545
        %v547 = vlaneseq
        %v548 = vshrl.u32 %v547, 7
        %v549 = vsub.s32 0, %v548
        %v550 = vrot.slane %v396, %v549
        %v551 = vlaneseq
        %v552 = vshrl.u32 %v551, 7
        %v553 = vsub.s32 0, %v552
        %v554 = vrot.slane %v405, %v553
        %v555 = vmul.f32 %v541, %v546
        %v556 = vmul.f32 %v541, %v550
        %v557 = vmul.f32 %v541, %v554
        %561 = vrot.lane.b32.xlu0 %v555, 127
        %v562 = vpop.permute.xlu0 %561
        %563 = vrot.lane.b32.xlu0 %v556, 127
        %v564 = vpop.permute.xlu0 %563
        %565 = vrot.lane.b32.xlu0 %v557, 127
        %v566 = vpop.permute.xlu0 %565
        %vm567 = vcmask 1039360
        %v568 = vsel %vm567, %v562, %v564
        %v569 = vsel %vm567, %v564, %v566
        %v572 = vadd.f32 %v534, %v568
        %v573 = vadd.f32 %v535, %v569
        %574 = vset.pattern.permute.xlu0 1
        %575 = vperm.xlu0 %574, %v537
        %v576 = vpop.permute.xlu0 %575
        %v578 = vlaneseq
        %v579 = vshrl.u32 %v578, 7
        %v580 = vsub.s32 1, %v579
        %v581 = vrot.slane %v404, %v580
        %v582 = vlaneseq
        %v583 = vshrl.u32 %v582, 7
        %v584 = vsub.s32 1, %v583
        %v585 = vrot.slane %v396, %v584
        %v586 = vlaneseq
        %v587 = vshrl.u32 %v586, 7
        %v588 = vsub.s32 1, %v587
        %v589 = vrot.slane %v405, %v588
        %v590 = vmul.f32 %v576, %v581
        %v591 = vmul.f32 %v576, %v585
        %v592 = vmul.f32 %v576, %v589
        %596 = vrot.lane.b32.xlu0 %v590, 127
        %v597 = vpop.permute.xlu0 %596
        %598 = vrot.lane.b32.xlu0 %v591, 127
        %v599 = vpop.permute.xlu0 %598
        %600 = vrot.lane.b32.xlu0 %v592, 127
        %v601 = vpop.permute.xlu0 %600
        %v602 = vsel %vm567, %v597, %v599
        %v603 = vsel %vm567, %v599, %v601
        %v606 = vadd.f32 %v572, %v602
        %v607 = vadd.f32 %v573, %v603
        %608 = vset.pattern.permute.xlu0 2
        %609 = vperm.xlu0 %608, %v537
        %v610 = vpop.permute.xlu0 %609
        %v612 = vlaneseq
        %v613 = vshrl.u32 %v612, 7
        %v614 = vsub.s32 2, %v613
        %v615 = vrot.slane %v404, %v614
        %v616 = vlaneseq
        %v617 = vshrl.u32 %v616, 7
        %v618 = vsub.s32 2, %v617
        %v619 = vrot.slane %v396, %v618
        %v620 = vlaneseq
        %v621 = vshrl.u32 %v620, 7
        %v622 = vsub.s32 2, %v621
        %v623 = vrot.slane %v405, %v622
        %v624 = vmul.f32 %v610, %v615
        %v625 = vmul.f32 %v610, %v619
        %v626 = vmul.f32 %v610, %v623
        %630 = vrot.lane.b32.xlu0 %v624, 127
        %v631 = vpop.permute.xlu0 %630
        %632 = vrot.lane.b32.xlu0 %v625, 127
        %v633 = vpop.permute.xlu0 %632
        %634 = vrot.lane.b32.xlu0 %v626, 127
        %v635 = vpop.permute.xlu0 %634
        %v636 = vsel %vm567, %v631, %v633
        %v637 = vsel %vm567, %v633, %v635
        %v640 = vadd.f32 %v606, %v636
        %v641 = vadd.f32 %v607, %v637
        %642 = vset.pattern.permute.xlu0 3
        %643 = vperm.xlu0 %642, %v537
        %v644 = vpop.permute.xlu0 %643
        %v646 = vlaneseq
        %v647 = vshrl.u32 %v646, 7
        %v648 = vsub.s32 3, %v647
        %v649 = vrot.slane %v404, %v648
        %v650 = vlaneseq
        %v651 = vshrl.u32 %v650, 7
        %v652 = vsub.s32 3, %v651
        %v653 = vrot.slane %v396, %v652
        %v654 = vlaneseq
        %v655 = vshrl.u32 %v654, 7
        %v656 = vsub.s32 3, %v655
        %v657 = vrot.slane %v405, %v656
        %v658 = vmul.f32 %v644, %v649
        %v659 = vmul.f32 %v644, %v653
        %v660 = vmul.f32 %v644, %v657
        %664 = vrot.lane.b32.xlu0 %v658, 127
        %v665 = vpop.permute.xlu0 %664
        %666 = vrot.lane.b32.xlu0 %v659, 127
        %v667 = vpop.permute.xlu0 %666
        %668 = vrot.lane.b32.xlu0 %v660, 127
        %v669 = vpop.permute.xlu0 %668
        %v670 = vsel %vm567, %v665, %v667
        %v671 = vsel %vm567, %v667, %v669
        %v674 = vadd.f32 %v640, %v670
        %v675 = vadd.f32 %v641, %v671
        %s676 = scalar_lea.vmem %s3, 8
        %v677 = vld [vmem:[%s676] sm:$0xf]
        %679 = vset.pattern.permute.xlu0 0
        %680 = vperm.xlu0 %679, %v677
        %v681 = vpop.permute.xlu0 %680
        %v683 = vlaneseq
        %v684 = vshrl.u32 %v683, 7
        %v685 = vsub.s32 0, %v684
        %v686 = vrot.slane %v467, %v685
        %v687 = vlaneseq
        %v688 = vshrl.u32 %v687, 7
        %v689 = vsub.s32 0, %v688
        %v690 = vrot.slane %v468, %v689
        %v691 = vlaneseq
        %v692 = vshrl.u32 %v691, 7
        %v693 = vsub.s32 0, %v692
        %v694 = vrot.slane %v469, %v693
        %v695 = vmul.f32 %v681, %v686
        %v696 = vmul.f32 %v681, %v690
        %v697 = vmul.f32 %v681, %v694
        %701 = vrot.lane.b32.xlu0 %v695, 126
        %v702 = vpop.permute.xlu0 %701
        %703 = vrot.lane.b32.xlu0 %v696, 126
        %v704 = vpop.permute.xlu0 %703
        %705 = vrot.lane.b32.xlu0 %v697, 126
        %v706 = vpop.permute.xlu0 %705
        %vm707 = vcmask 1031168
        %v708 = vsel %vm707, %v702, %v704
        %v709 = vsel %vm707, %v704, %v706
        %v712 = vadd.f32 %v674, %v708
        %v713 = vadd.f32 %v675, %v709
        %714 = vset.pattern.permute.xlu0 1
        %715 = vperm.xlu0 %714, %v677
        %v716 = vpop.permute.xlu0 %715
        %v718 = vlaneseq
        %v719 = vshrl.u32 %v718, 7
        %v720 = vsub.s32 1, %v719
        %v721 = vrot.slane %v467, %v720
        %v722 = vlaneseq
        %v723 = vshrl.u32 %v722, 7
        %v724 = vsub.s32 1, %v723
        %v725 = vrot.slane %v468, %v724
        %v726 = vlaneseq
        %v727 = vshrl.u32 %v726, 7
        %v728 = vsub.s32 1, %v727
        %v729 = vrot.slane %v469, %v728
        %v730 = vmul.f32 %v716, %v721
        %v731 = vmul.f32 %v716, %v725
        %v732 = vmul.f32 %v716, %v729
        %736 = vrot.lane.b32.xlu0 %v730, 126
        %v737 = vpop.permute.xlu0 %736
        %738 = vrot.lane.b32.xlu0 %v731, 126
        %v739 = vpop.permute.xlu0 %738
        %740 = vrot.lane.b32.xlu0 %v732, 126
        %v741 = vpop.permute.xlu0 %740
        %v742 = vsel %vm707, %v737, %v739
        %v743 = vsel %vm707, %v739, %v741
        %v746 = vadd.f32 %v712, %v742
        %v747 = vadd.f32 %v713, %v743
        %748 = vset.pattern.permute.xlu0 2
        %749 = vperm.xlu0 %748, %v677
        %v750 = vpop.permute.xlu0 %749
        %v752 = vlaneseq
        %v753 = vshrl.u32 %v752, 7
        %v754 = vsub.s32 2, %v753
        %v755 = vrot.slane %v467, %v754
        %v756 = vlaneseq
        %v757 = vshrl.u32 %v756, 7
        %v758 = vsub.s32 2, %v757
        %v759 = vrot.slane %v468, %v758
        %v760 = vlaneseq
        %v761 = vshrl.u32 %v760, 7
        %v762 = vsub.s32 2, %v761
        %v763 = vrot.slane %v469, %v762
        %v764 = vmul.f32 %v750, %v755
        %v765 = vmul.f32 %v750, %v759
        %v766 = vmul.f32 %v750, %v763
        %770 = vrot.lane.b32.xlu0 %v764, 126
        %v771 = vpop.permute.xlu0 %770
        %772 = vrot.lane.b32.xlu0 %v765, 126
        %v773 = vpop.permute.xlu0 %772
        %774 = vrot.lane.b32.xlu0 %v766, 126
        %v775 = vpop.permute.xlu0 %774
        %v776 = vsel %vm707, %v771, %v773
        %v777 = vsel %vm707, %v773, %v775
        %v780 = vadd.f32 %v746, %v776
        %v781 = vadd.f32 %v747, %v777
        %782 = vset.pattern.permute.xlu0 3
        %783 = vperm.xlu0 %782, %v677
        %v784 = vpop.permute.xlu0 %783
        %v786 = vlaneseq
        %v787 = vshrl.u32 %v786, 7
        %v788 = vsub.s32 3, %v787
        %v789 = vrot.slane %v467, %v788
        %v790 = vlaneseq
        %v791 = vshrl.u32 %v790, 7
        %v792 = vsub.s32 3, %v791
        %v793 = vrot.slane %v468, %v792
        %v794 = vlaneseq
        %v795 = vshrl.u32 %v794, 7
        %v796 = vsub.s32 3, %v795
        %v797 = vrot.slane %v469, %v796
        %v798 = vmul.f32 %v784, %v789
        %v799 = vmul.f32 %v784, %v793
        %v800 = vmul.f32 %v784, %v797
        %804 = vrot.lane.b32.xlu0 %v798, 126
        %v805 = vpop.permute.xlu0 %804
        %806 = vrot.lane.b32.xlu0 %v799, 126
        %v807 = vpop.permute.xlu0 %806
        %808 = vrot.lane.b32.xlu0 %v800, 126
        %v809 = vpop.permute.xlu0 %808
        %v810 = vsel %vm707, %v805, %v807
        %v811 = vsel %vm707, %v807, %v809
        %v814 = vadd.f32 %v780, %v810
        %v815 = vadd.f32 %v781, %v811
        %s816 = scalar_lea.vmem %s3, 12
        %v817 = vld [vmem:[%s816] sm:$0xf]
        %819 = vset.pattern.permute.xlu0 0
        %820 = vperm.xlu0 %819, %v817
        %v821 = vpop.permute.xlu0 %820
        %v823 = vlaneseq
        %v824 = vshrl.u32 %v823, 7
        %v825 = vsub.s32 0, %v824
        %v826 = vrot.slane %v457, %v825
        %v827 = vmul.f32 %v821, %v479
        %v828 = vmul.f32 %v821, %v483
        %v829 = vmul.f32 %v821, %v826
        %833 = vrot.lane.b32.xlu0 %v827, 112
        %v834 = vpop.permute.xlu0 %833
        %835 = vrot.lane.b32.xlu0 %v828, 112
        %v836 = vpop.permute.xlu0 %835
        %837 = vrot.lane.b32.xlu0 %v829, 112
        %v838 = vpop.permute.xlu0 %837
        %vm839 = vcmask 916480
        %v840 = vsel %vm839, %v834, %v836
        %v841 = vsel %vm839, %v836, %v838
        %v844 = vadd.f32 %v814, %v840
        %v845 = vadd.f32 %v815, %v841
        %846 = vset.pattern.permute.xlu0 1
        %847 = vperm.xlu0 %846, %v817
        %v848 = vpop.permute.xlu0 %847
        %v850 = vlaneseq
        %v851 = vshrl.u32 %v850, 7
        %v852 = vsub.s32 1, %v851
        %v853 = vrot.slane %v457, %v852
        %v854 = vmul.f32 %v848, %v495
        %v855 = vmul.f32 %v848, %v499
        %v856 = vmul.f32 %v848, %v853
        %860 = vrot.lane.b32.xlu0 %v854, 112
        %v861 = vpop.permute.xlu0 %860
        %862 = vrot.lane.b32.xlu0 %v855, 112
        %v863 = vpop.permute.xlu0 %862
        %864 = vrot.lane.b32.xlu0 %v856, 112
        %v865 = vpop.permute.xlu0 %864
        %v866 = vsel %vm839, %v861, %v863
        %v867 = vsel %vm839, %v863, %v865
        %v870 = vadd.f32 %v844, %v866
        %v871 = vadd.f32 %v845, %v867
        %872 = vset.pattern.permute.xlu0 2
        %873 = vperm.xlu0 %872, %v817
        %v874 = vpop.permute.xlu0 %873
        %v876 = vlaneseq
        %v877 = vshrl.u32 %v876, 7
        %v878 = vsub.s32 2, %v877
        %v879 = vrot.slane %v457, %v878
        %v880 = vmul.f32 %v874, %v511
        %v881 = vmul.f32 %v874, %v515
        %v882 = vmul.f32 %v874, %v879
        %886 = vrot.lane.b32.xlu0 %v880, 112
        %v887 = vpop.permute.xlu0 %886
        %888 = vrot.lane.b32.xlu0 %v881, 112
        %v889 = vpop.permute.xlu0 %888
        %890 = vrot.lane.b32.xlu0 %v882, 112
        %v891 = vpop.permute.xlu0 %890
        %v892 = vsel %vm839, %v887, %v889
        %v893 = vsel %vm839, %v889, %v891
        %v896 = vadd.f32 %v870, %v892
        %v897 = vadd.f32 %v871, %v893
        %898 = vset.pattern.permute.xlu0 3
        %899 = vperm.xlu0 %898, %v817
        %v900 = vpop.permute.xlu0 %899
        %v902 = vlaneseq
        %v903 = vshrl.u32 %v902, 7
        %v904 = vsub.s32 3, %v903
        %v905 = vrot.slane %v457, %v904
        %v906 = vmul.f32 %v900, %v527
        %v907 = vmul.f32 %v900, %v531
        %v908 = vmul.f32 %v900, %v905
        %912 = vrot.lane.b32.xlu0 %v906, 112
        %v913 = vpop.permute.xlu0 %912
        %914 = vrot.lane.b32.xlu0 %v907, 112
        %v915 = vpop.permute.xlu0 %914
        %916 = vrot.lane.b32.xlu0 %v908, 112
        %v917 = vpop.permute.xlu0 %916
        %v918 = vsel %vm839, %v913, %v915
        %v919 = vsel %vm839, %v915, %v917
        %v922 = vadd.f32 %v896, %v918
        %v923 = vadd.f32 %v897, %v919
        %s924 = scalar_lea.vmem %s3, 16
        %v925 = vld [vmem:[%s924] sm:$0xf]
        %927 = vset.pattern.permute.xlu0 0
        %928 = vperm.xlu0 %927, %v925
        %v929 = vpop.permute.xlu0 %928
        %v931 = vlaneseq
        %v932 = vshrl.u32 %v931, 7
        %v933 = vsub.s32 0, %v932
        %v934 = vrot.slane %v372, %v933
        %v935 = vlaneseq
        %v936 = vshrl.u32 %v935, 7
        %v937 = vsub.s32 4, %v936
        %v938 = vrot.slane %v372, %v937
        %v941 = vlaneseq
        %v942 = vshrl.u32 %v941, 7
        %v943 = vsub.s32 0, %v942
        %v944 = vrot.slane %v934, %v943
        %v945 = vlaneseq
        %v946 = vshrl.u32 %v945, 7
        %v947 = vsub.s32 0, %v946
        %v948 = vrot.slane %v938, %v947
        %v949 = vmul.f32 %v929, %v944
        %v950 = vmul.f32 %v929, %v948
        %v951 = vadd.f32 %v922, %v949
        %v952 = vadd.f32 %v923, %v950
        %953 = vset.pattern.permute.xlu0 1
        %954 = vperm.xlu0 %953, %v925
        %v955 = vpop.permute.xlu0 %954
        %v957 = vlaneseq
        %v958 = vshrl.u32 %v957, 7
        %v959 = vsub.s32 1, %v958
        %v960 = vrot.slane %v372, %v959
        %v961 = vlaneseq
        %v962 = vshrl.u32 %v961, 7
        %v963 = vsub.s32 5, %v962
        %v964 = vrot.slane %v372, %v963
        %v967 = vlaneseq
        %v968 = vshrl.u32 %v967, 7
        %v969 = vsub.s32 1, %v968
        %v970 = vrot.slane %v960, %v969
        %v971 = vlaneseq
        %v972 = vshrl.u32 %v971, 7
        %v973 = vsub.s32 1, %v972
        %v974 = vrot.slane %v964, %v973
        %v975 = vmul.f32 %v955, %v970
        %v976 = vmul.f32 %v955, %v974
        %v977 = vadd.f32 %v951, %v975
        %v978 = vadd.f32 %v952, %v976
        %979 = vset.pattern.permute.xlu0 2
        %980 = vperm.xlu0 %979, %v925
        %v981 = vpop.permute.xlu0 %980
        %v983 = vlaneseq
        %v984 = vshrl.u32 %v983, 7
        %v985 = vsub.s32 2, %v984
        %v986 = vrot.slane %v372, %v985
        %v987 = vlaneseq
        %v988 = vshrl.u32 %v987, 7
        %v989 = vsub.s32 6, %v988
        %v990 = vrot.slane %v372, %v989
        %v993 = vlaneseq
        %v994 = vshrl.u32 %v993, 7
        %v995 = vsub.s32 2, %v994
        %v996 = vrot.slane %v986, %v995
        %v997 = vlaneseq
        %v998 = vshrl.u32 %v997, 7
        %v999 = vsub.s32 2, %v998
        %v1000 = vrot.slane %v990, %v999
        %v1001 = vmul.f32 %v981, %v996
        %v1002 = vmul.f32 %v981, %v1000
        %v1003 = vadd.f32 %v977, %v1001
        %v1004 = vadd.f32 %v978, %v1002
        %1005 = vset.pattern.permute.xlu0 3
        %1006 = vperm.xlu0 %1005, %v925
        %v1007 = vpop.permute.xlu0 %1006
        %v1009 = vlaneseq
        %v1010 = vshrl.u32 %v1009, 7
        %v1011 = vsub.s32 3, %v1010
        %v1012 = vrot.slane %v372, %v1011
        %v1013 = vlaneseq
        %v1014 = vshrl.u32 %v1013, 7
        %v1015 = vsub.s32 7, %v1014
        %v1016 = vrot.slane %v372, %v1015
        %v1019 = vlaneseq
        %v1020 = vshrl.u32 %v1019, 7
        %v1021 = vsub.s32 3, %v1020
        %v1022 = vrot.slane %v1012, %v1021
        %v1023 = vlaneseq
        %v1024 = vshrl.u32 %v1023, 7
        %v1025 = vsub.s32 3, %v1024
        %v1026 = vrot.slane %v1016, %v1025
        %v1027 = vmul.f32 %v1007, %v1022
        %v1028 = vmul.f32 %v1007, %v1026
        %v1029 = vadd.f32 %v1003, %v1027
        %v1030 = vadd.f32 %v1004, %v1028
        %s1031 = scalar_lea.vmem %s3, 20
        %v1032 = vld [vmem:[%s1031] sm:$0xf]
        %1034 = vset.pattern.permute.xlu0 0
        %1035 = vperm.xlu0 %1034, %v1032
        %v1036 = vpop.permute.xlu0 %1035
        %v1038 = vmul.f32 %v1036, %v686
        %v1039 = vmul.f32 %v1036, %v690
        %v1040 = vmul.f32 %v1036, %v694
        %1044 = vrot.lane.b32.xlu0 %v1038, 110
        %v1045 = vpop.permute.xlu0 %1044
        %1046 = vrot.lane.b32.xlu0 %v1039, 110
        %v1047 = vpop.permute.xlu0 %1046
        %1048 = vrot.lane.b32.xlu0 %v1040, 110
        %v1049 = vpop.permute.xlu0 %1048
        %vm1050 = vcmask 900096
        %v1051 = vsel %vm1050, %v1045, %v1047
        %v1052 = vsel %vm1050, %v1047, %v1049
        %v1055 = vadd.f32 %v1029, %v1051
        %v1056 = vadd.f32 %v1030, %v1052
        %1057 = vset.pattern.permute.xlu0 1
        %1058 = vperm.xlu0 %1057, %v1032
        %v1059 = vpop.permute.xlu0 %1058
        %v1061 = vmul.f32 %v1059, %v721
        %v1062 = vmul.f32 %v1059, %v725
        %v1063 = vmul.f32 %v1059, %v729
        %1067 = vrot.lane.b32.xlu0 %v1061, 110
        %v1068 = vpop.permute.xlu0 %1067
        %1069 = vrot.lane.b32.xlu0 %v1062, 110
        %v1070 = vpop.permute.xlu0 %1069
        %1071 = vrot.lane.b32.xlu0 %v1063, 110
        %v1072 = vpop.permute.xlu0 %1071
        %v1073 = vsel %vm1050, %v1068, %v1070
        %v1074 = vsel %vm1050, %v1070, %v1072
        %v1077 = vadd.f32 %v1055, %v1073
        %v1078 = vadd.f32 %v1056, %v1074
        %1079 = vset.pattern.permute.xlu0 2
        %1080 = vperm.xlu0 %1079, %v1032
        %v1081 = vpop.permute.xlu0 %1080
        %v1083 = vmul.f32 %v1081, %v755
        %v1084 = vmul.f32 %v1081, %v759
        %v1085 = vmul.f32 %v1081, %v763
        %1089 = vrot.lane.b32.xlu0 %v1083, 110
        %v1090 = vpop.permute.xlu0 %1089
        %1091 = vrot.lane.b32.xlu0 %v1084, 110
        %v1092 = vpop.permute.xlu0 %1091
        %1093 = vrot.lane.b32.xlu0 %v1085, 110
        %v1094 = vpop.permute.xlu0 %1093
        %v1095 = vsel %vm1050, %v1090, %v1092
        %v1096 = vsel %vm1050, %v1092, %v1094
        %v1099 = vadd.f32 %v1077, %v1095
        %v1100 = vadd.f32 %v1078, %v1096
        %1101 = vset.pattern.permute.xlu0 3
        %1102 = vperm.xlu0 %1101, %v1032
        %v1103 = vpop.permute.xlu0 %1102
        %v1105 = vmul.f32 %v1103, %v789
        %v1106 = vmul.f32 %v1103, %v793
        %v1107 = vmul.f32 %v1103, %v797
        %1111 = vrot.lane.b32.xlu0 %v1105, 110
        %v1112 = vpop.permute.xlu0 %1111
        %1113 = vrot.lane.b32.xlu0 %v1106, 110
        %v1114 = vpop.permute.xlu0 %1113
        %1115 = vrot.lane.b32.xlu0 %v1107, 110
        %v1116 = vpop.permute.xlu0 %1115
        %v1117 = vsel %vm1050, %v1112, %v1114
        %v1118 = vsel %vm1050, %v1114, %v1116
        %v1121 = vadd.f32 %v1099, %v1117
        %v1122 = vadd.f32 %v1100, %v1118
        %s1123 = scalar_lea.vmem %s3, 24
        %v1124 = vld [vmem:[%s1123] sm:$0xf]
        %1126 = vset.pattern.permute.xlu0 0
        %1127 = vperm.xlu0 %1126, %v1124
        %v1128 = vpop.permute.xlu0 %1127
        %v1130 = vmul.f32 %v1128, %v479
        %v1131 = vmul.f32 %v1128, %v483
        %v1132 = vmul.f32 %v1128, %v826
        %1136 = vrot.lane.b32.xlu0 %v1130, 96
        %v1137 = vpop.permute.xlu0 %1136
        %1138 = vrot.lane.b32.xlu0 %v1131, 96
        %v1139 = vpop.permute.xlu0 %1138
        %1140 = vrot.lane.b32.xlu0 %v1132, 96
        %v1141 = vpop.permute.xlu0 %1140
        %vm1142 = vcmask 785408
        %v1143 = vsel %vm1142, %v1137, %v1139
        %v1144 = vsel %vm1142, %v1139, %v1141
        %v1147 = vadd.f32 %v1121, %v1143
        %v1148 = vadd.f32 %v1122, %v1144
        %1149 = vset.pattern.permute.xlu0 1
        %1150 = vperm.xlu0 %1149, %v1124
        %v1151 = vpop.permute.xlu0 %1150
        %v1153 = vmul.f32 %v1151, %v495
        %v1154 = vmul.f32 %v1151, %v499
        %v1155 = vmul.f32 %v1151, %v853
        %1159 = vrot.lane.b32.xlu0 %v1153, 96
        %v1160 = vpop.permute.xlu0 %1159
        %1161 = vrot.lane.b32.xlu0 %v1154, 96
        %v1162 = vpop.permute.xlu0 %1161
        %1163 = vrot.lane.b32.xlu0 %v1155, 96
        %v1164 = vpop.permute.xlu0 %1163
        %v1165 = vsel %vm1142, %v1160, %v1162
        %v1166 = vsel %vm1142, %v1162, %v1164
        %v1169 = vadd.f32 %v1147, %v1165
        %v1170 = vadd.f32 %v1148, %v1166
        %1171 = vset.pattern.permute.xlu0 2
        %1172 = vperm.xlu0 %1171, %v1124
        %v1173 = vpop.permute.xlu0 %1172
        %v1175 = vmul.f32 %v1173, %v511
        %v1176 = vmul.f32 %v1173, %v515
        %v1177 = vmul.f32 %v1173, %v879
        %1181 = vrot.lane.b32.xlu0 %v1175, 96
        %v1182 = vpop.permute.xlu0 %1181
        %1183 = vrot.lane.b32.xlu0 %v1176, 96
        %v1184 = vpop.permute.xlu0 %1183
        %1185 = vrot.lane.b32.xlu0 %v1177, 96
        %v1186 = vpop.permute.xlu0 %1185
        %v1187 = vsel %vm1142, %v1182, %v1184
        %v1188 = vsel %vm1142, %v1184, %v1186
        %v1191 = vadd.f32 %v1169, %v1187
        %v1192 = vadd.f32 %v1170, %v1188
        %1193 = vset.pattern.permute.xlu0 3
        %1194 = vperm.xlu0 %1193, %v1124
        %v1195 = vpop.permute.xlu0 %1194
        %v1197 = vmul.f32 %v1195, %v527
        %v1198 = vmul.f32 %v1195, %v531
        %v1199 = vmul.f32 %v1195, %v905
        %1203 = vrot.lane.b32.xlu0 %v1197, 96
        %v1204 = vpop.permute.xlu0 %1203
        %1205 = vrot.lane.b32.xlu0 %v1198, 96
        %v1206 = vpop.permute.xlu0 %1205
        %1207 = vrot.lane.b32.xlu0 %v1199, 96
        %v1208 = vpop.permute.xlu0 %1207
        %v1209 = vsel %vm1142, %v1204, %v1206
        %v1210 = vsel %vm1142, %v1206, %v1208
        %v1213 = vadd.f32 %v1191, %v1209
        %v1214 = vadd.f32 %v1192, %v1210
        %s1215 = scalar_lea.vmem %s3, 28
        %v1216 = vld [vmem:[%s1215] sm:$0xf]
        %1218 = vset.pattern.permute.xlu0 0
        %1219 = vperm.xlu0 %1218, %v1216
        %v1220 = vpop.permute.xlu0 %1219
        %v1222 = vmul.f32 %v1220, %v546
        %v1223 = vmul.f32 %v1220, %v550
        %v1224 = vmul.f32 %v1220, %v554
        %1228 = vrot.lane.b32.xlu0 %v1222, 95
        %v1229 = vpop.permute.xlu0 %1228
        %1230 = vrot.lane.b32.xlu0 %v1223, 95
        %v1231 = vpop.permute.xlu0 %1230
        %1232 = vrot.lane.b32.xlu0 %v1224, 95
        %v1233 = vpop.permute.xlu0 %1232
        %vm1234 = vcmask 777216
        %v1235 = vsel %vm1234, %v1229, %v1231
        %v1236 = vsel %vm1234, %v1231, %v1233
        %v1239 = vadd.f32 %v1213, %v1235
        %v1240 = vadd.f32 %v1214, %v1236
        %1241 = vset.pattern.permute.xlu0 1
        %1242 = vperm.xlu0 %1241, %v1216
        %v1243 = vpop.permute.xlu0 %1242
        %v1245 = vmul.f32 %v1243, %v581
        %v1246 = vmul.f32 %v1243, %v585
        %v1247 = vmul.f32 %v1243, %v589
        %1251 = vrot.lane.b32.xlu0 %v1245, 95
        %v1252 = vpop.permute.xlu0 %1251
        %1253 = vrot.lane.b32.xlu0 %v1246, 95
        %v1254 = vpop.permute.xlu0 %1253
        %1255 = vrot.lane.b32.xlu0 %v1247, 95
        %v1256 = vpop.permute.xlu0 %1255
        %v1257 = vsel %vm1234, %v1252, %v1254
        %v1258 = vsel %vm1234, %v1254, %v1256
        %v1261 = vadd.f32 %v1239, %v1257
        %v1262 = vadd.f32 %v1240, %v1258
        %1263 = vset.pattern.permute.xlu0 2
        %1264 = vperm.xlu0 %1263, %v1216
        %v1265 = vpop.permute.xlu0 %1264
        %v1267 = vmul.f32 %v1265, %v615
        %v1268 = vmul.f32 %v1265, %v619
        %v1269 = vmul.f32 %v1265, %v623
        %1273 = vrot.lane.b32.xlu0 %v1267, 95
        %v1274 = vpop.permute.xlu0 %1273
        %1275 = vrot.lane.b32.xlu0 %v1268, 95
        %v1276 = vpop.permute.xlu0 %1275
        %1277 = vrot.lane.b32.xlu0 %v1269, 95
        %v1278 = vpop.permute.xlu0 %1277
        %v1279 = vsel %vm1234, %v1274, %v1276
        %v1280 = vsel %vm1234, %v1276, %v1278
        %v1283 = vadd.f32 %v1261, %v1279
        %v1284 = vadd.f32 %v1262, %v1280
        %1285 = vset.pattern.permute.xlu0 3
        %1286 = vperm.xlu0 %1285, %v1216
        %v1287 = vpop.permute.xlu0 %1286
        %v1289 = vmul.f32 %v1287, %v649
        %v1290 = vmul.f32 %v1287, %v653
        %v1291 = vmul.f32 %v1287, %v657
        %1295 = vrot.lane.b32.xlu0 %v1289, 95
        %v1296 = vpop.permute.xlu0 %1295
        %1297 = vrot.lane.b32.xlu0 %v1290, 95
        %v1298 = vpop.permute.xlu0 %1297
        %1299 = vrot.lane.b32.xlu0 %v1291, 95
        %v1300 = vpop.permute.xlu0 %1299
        %v1301 = vsel %vm1234, %v1296, %v1298
        %v1302 = vsel %vm1234, %v1298, %v1300
        %v1305 = vadd.f32 %v1283, %v1301
        %v1306 = vadd.f32 %v1284, %v1302
        %s1307 = scalar_lea.vmem %s3, 32
        %v1308 = vld [vmem:[%s1307] sm:$0xf]
        %1310 = vset.pattern.permute.xlu0 0
        %1311 = vperm.xlu0 %1310, %v1308
        %v1312 = vpop.permute.xlu0 %1311
        %v1314 = vmul.f32 %v1312, %v686
        %v1315 = vmul.f32 %v1312, %v690
        %v1316 = vmul.f32 %v1312, %v694
        %1320 = vrot.lane.b32.xlu0 %v1314, 94
        %v1321 = vpop.permute.xlu0 %1320
        %1322 = vrot.lane.b32.xlu0 %v1315, 94
        %v1323 = vpop.permute.xlu0 %1322
        %1324 = vrot.lane.b32.xlu0 %v1316, 94
        %v1325 = vpop.permute.xlu0 %1324
        %vm1326 = vcmask 769024
        %v1327 = vsel %vm1326, %v1321, %v1323
        %v1328 = vsel %vm1326, %v1323, %v1325
        %v1331 = vadd.f32 %v1305, %v1327
        %v1332 = vadd.f32 %v1306, %v1328
        %1333 = vset.pattern.permute.xlu0 1
        %1334 = vperm.xlu0 %1333, %v1308
        %v1335 = vpop.permute.xlu0 %1334
        %v1337 = vmul.f32 %v1335, %v721
        %v1338 = vmul.f32 %v1335, %v725
        %v1339 = vmul.f32 %v1335, %v729
        %1343 = vrot.lane.b32.xlu0 %v1337, 94
        %v1344 = vpop.permute.xlu0 %1343
        %1345 = vrot.lane.b32.xlu0 %v1338, 94
        %v1346 = vpop.permute.xlu0 %1345
        %1347 = vrot.lane.b32.xlu0 %v1339, 94
        %v1348 = vpop.permute.xlu0 %1347
        %v1349 = vsel %vm1326, %v1344, %v1346
        %v1350 = vsel %vm1326, %v1346, %v1348
        %v1353 = vadd.f32 %v1331, %v1349
        %v1354 = vadd.f32 %v1332, %v1350
        %1355 = vset.pattern.permute.xlu0 2
        %1356 = vperm.xlu0 %1355, %v1308
        %v1357 = vpop.permute.xlu0 %1356
        %v1359 = vmul.f32 %v1357, %v755
        %v1360 = vmul.f32 %v1357, %v759
        %v1361 = vmul.f32 %v1357, %v763
        %1365 = vrot.lane.b32.xlu0 %v1359, 94
        %v1366 = vpop.permute.xlu0 %1365
        %1367 = vrot.lane.b32.xlu0 %v1360, 94
        %v1368 = vpop.permute.xlu0 %1367
        %1369 = vrot.lane.b32.xlu0 %v1361, 94
        %v1370 = vpop.permute.xlu0 %1369
        %v1371 = vsel %vm1326, %v1366, %v1368
        %v1372 = vsel %vm1326, %v1368, %v1370
        %v1375 = vadd.f32 %v1353, %v1371
        %v1376 = vadd.f32 %v1354, %v1372
        %1377 = vset.pattern.permute.xlu0 3
        %1378 = vperm.xlu0 %1377, %v1308
        %v1379 = vpop.permute.xlu0 %1378
        %v1381 = vmul.f32 %v1379, %v789
        %v1382 = vmul.f32 %v1379, %v793
        %v1383 = vmul.f32 %v1379, %v797
        %1387 = vrot.lane.b32.xlu0 %v1381, 94
        %v1388 = vpop.permute.xlu0 %1387
        %1389 = vrot.lane.b32.xlu0 %v1382, 94
        %v1390 = vpop.permute.xlu0 %1389
        %1391 = vrot.lane.b32.xlu0 %v1383, 94
        %v1392 = vpop.permute.xlu0 %1391
        %v1393 = vsel %vm1326, %v1388, %v1390
        %v1394 = vsel %vm1326, %v1390, %v1392
        %v1397 = vadd.f32 %v1375, %v1393
        %v1398 = vadd.f32 %v1376, %v1394
        %v1399 = vld [vmem:[%s4] sm:$0xf]
        %1401 = vset.pattern.permute.xlu0 0
        %1402 = vperm.xlu0 %1401, %v1399
        %v1403 = vpop.permute.xlu0 %1402
        %v1405 = vadd.f32 %v1397, %v1403
        %v1406 = vadd.f32 %v1398, %v1403
        %v1408 = vadd.f32 %v1405, %v372
        %v1409 = vadd.f32 %v1406, %v390
        %v1412 = vcombine.low %v1408, %v1409
        %1414 = vst [vmem:[%s328] sm:$0xff] %v1412
        %s1415 = sand.u32 %s183, 1
        %s1416 = scalar_lea.sflag [#allocation3], %s1415
        %s1417 = sand.u32 %s183, 1
        %s1418 = smul.addr %s1417, 8
        %s1419 = scalar_lea.vmem [#allocation2], %s1418
        // Predicated region
        $region41: #{tpu_custom_call.1} parent=39 // pred_check
          %p1420 = pneg %p193
        $region42: #{tpu_custom_call.1} parent=39 // pred_check_branch
          %1422 = sbr.rel (%p1420) target = $region44
        $region43: #{tpu_custom_call.1} parent=39 // pred_region
          %s1423 = smul.u32 2, %s24
          %s1425 = ssub.s32 128, 128
          %1426 = vsyncadd %s1416, %s1425
          %s1427 = smul.addr %s23, 2
          %s1428 = sadd.s32 %s1423, %s1427
          %s1429 = smul.addr %s1428, 64
          %s1430 = scalar_lea.hbm %s5, %s1429
          %s1432 = sshll.u32 %s1419, 4
          %s1433 = int_to_ptr.vmem [resolvable:$true] %s1432
          %1435 = dma.vmem_to_hbm [thread:$0]  %s1433, 128, %s1430, %s1416
        $region44: #{tpu_custom_call.1} parent=39 // pred_fallthru
          _
      $region40: #{tpu_custom_call.1} parent=5 // pred_fallthru
        _
      %p1436 = scmp.le.s32.totalorder 2, %s14
      // Predicated region
      $region45: #{tpu_custom_call.1} parent=5 // pred_check
        %p1437 = pneg %p1436
      $region46: #{tpu_custom_call.1} parent=5 // pred_check_branch
        %1439 = sbr.rel (%p1437) target = $region48
      $region47: #{tpu_custom_call.1} parent=5 // pred_region
        %s1440 = ssub.s32 %s14, 2
        // Predicated region
        $region49: #{tpu_custom_call.1} parent=47 // pred_check
          %p1441 = pneg %p199
        $region50: #{tpu_custom_call.1} parent=47 // pred_check_branch
          %1443 = sbr.rel (%p1441) target = $region52
        $region51: #{tpu_custom_call.1} parent=47 // pred_region
          %s1444 = sand.u32 %s184, 1
          %s1445 = scalar_lea.sflag [#allocation3], %s1444
          %s1446 = sand.u32 %s184, 1
          %s1447 = smul.addr %s1446, 8
          %s1448 = scalar_lea.vmem [#allocation2], %s1447
          %1449 = dma.done %s1445, 128
        $region52: #{tpu_custom_call.1} parent=47 // pred_fallthru
          _
      $region48: #{tpu_custom_call.1} parent=5 // pred_fallthru
        _
    $region6: #{tpu_custom_call.1} parent=1 // loop_footer
      %s18 = sadd.s32 1, %s14
    $region7: #{tpu_custom_call.1} parent=1 // loop_footer_branch
      %13 = sbr.rel target = $region3
    $region8: #{tpu_custom_call.1} parent=1 // loop_exit
      _
    %1450 = vsyncpa [#allocation3], 1
    %s1451 = scalar_lea.sflag [#allocation3], 1
    %1452 = vsyncpa %s1451, 1

</llo_original>
